<compile_context>
chip_gen: v7x
topology: tpu7x:2x2x1
jax: 0.10.0
libtpu: 0.0.40
codegen_flags: <defaults>
</compile_context>

<pallas_src>
import numpy as np
import jax
import jax.numpy as jnp
from jax.experimental import pallas as pl
from jax.experimental.pallas import tpu as pltpu

DOWN_SAMPLE = 8
PATCH_SIZE = 10
STRIDE = PATCH_SIZE // 4            # 2
FEAT_DIM = 512                      # CLIP image feature dim (sum_feature has 512 ch)
D_RAW = PATCH_SIZE * PATCH_SIZE * 3 # 300
D_PAD = 384                         # pad 300 -> multiple of 128 for clean MXU tiles
MXU_K = 256                         # pad patch count to the MXU contraction width
P_TILE = 256                        # encode-kernel patch tile (fills 256-wide MXU)
P_CHUNK_MAX = 2048                  # max patches per kernel-B reduction step


# --------------------------------------------------------------------------- #
# Kernel A: patch encoder (stand-in for CLIP model.encode_image)
# --------------------------------------------------------------------------- #
def _encode_kernel(patches_ref, w_ref, b_ref, feats_ref):
    # TODO(synk): the real CLIP ViT (patch-embed conv, transformer blocks,
    # layernorms, final projection) has no compact Pallas equivalent here; a
    # deterministic linear encoder stands in for model.encode_image.
    acc = jnp.dot(patches_ref[...], w_ref[...],          # bf16 x bf16 on the MXU
                  preferred_element_type=jnp.float32)    # (P_TILE, F) f32
    feats_ref[...] = (acc + b_ref[...]).astype(jnp.bfloat16)


# --------------------------------------------------------------------------- #
# Kernel B: scatter-add of patch features over their boxes + count normalize
# --------------------------------------------------------------------------- #
def _scatter_avg_kernel(feats_ref, rb_ref, colmask_ref, out_ref, sum_acc, cnt_acc):
    """One (image-row tile, patch chunk) step of the averaged feature map.

    feats_ref   : (Pc, F)          bf16  encoded patch features for this chunk
    rb_ref      : (2, Pc)          i32   rows = (upper, lower)
    colmask_ref : (W, Pc)          bf16  grid-invariant 0/1 column coverage
    out_ref     : (tile_h, W, F)   f32   averaged feature per pixel
    sum_acc     : (tile_h*W, F)    f32   feature accumulator (across P chunks)
    cnt_acc     : (tile_h, W)      f32   coverage-count accumulator
    """
    p_idx = pl.program_id(1)

    @pl.when(p_idx == 0)
    def _():
        sum_acc[...] = jnp.zeros_like(sum_acc)
        cnt_acc[...] = jnp.zeros_like(cnt_acc)

    tile_h, w, f = out_ref.shape
    p_chunk = feats_ref.shape[0]

    # Row coverage of this tile's rows vs this chunk's patches (no div/mod).
    y0 = pl.program_id(0) * tile_h
    y = y0 + jax.lax.broadcasted_iota(jnp.int32, (tile_h, p_chunk), 0)
    upper = rb_ref[0:1, :]
    lower = rb_ref[1:2, :]
    row_bf = ((y >= upper) & (y < lower)).astype(jnp.bfloat16)       # (tile_h, Pc)
    col_bf = colmask_ref[...]                                        # (W, Pc) bf16

    # Per-pixel 0/1 mask built directly in bf16: one broadcast multiply, no
    # (tile_h, W, Pc) boolean intermediate / full-size cast.  Exactly 0/1, so
    # bf16 is lossless for the mask.
    mask_bf = (row_bf[:, None, :] * col_bf[None, :, :]).reshape(tile_h * w, p_chunk)

    # Scatter-add as bf16 MXU matmuls with f32 accumulation.
    sum_acc[...] += jnp.dot(mask_bf, feats_ref[...],
                            preferred_element_type=jnp.float32)      # (tile_h*W, F)
    cnt_acc[...] += jax.lax.dot_general(                             # (tile_h, W)
        row_bf, col_bf, (((1,), (1,)), ((), ())),
        preferred_element_type=jnp.float32)

    @pl.when(p_idx == pl.num_programs(1) - 1)
    def _():
        # count==0 happens only for padded / uncovered pixels -> emit 0, not NaN.
        inv = pl.reciprocal(jnp.maximum(cnt_acc[...], 1.0), approx=True)  # EUP
        out_ref[...] = (sum_acc[...].reshape(tile_h, w, f)
                        * inv[:, :, None]).astype(out_ref.dtype)


# --------------------------------------------------------------------------- #
# Host-side glue
# --------------------------------------------------------------------------- #
def build_patches_and_bounds(ds_img_np, seed=0):
    """Replicates the patch loop of the PyTorch forward (deterministic).

    Python `random.randint` jitter is replaced with a seeded numpy RandomState;
    PIL crop+preprocess is replaced with a nearest-neighbor resize of the crop
    to PATCH_SIZE x PATCH_SIZE (no CLIP mean/std normalization).
    The patch count is zero-padded to a multiple of the MXU contraction width;
    padded patches get degenerate bounds (left == right == 0).
    """
    rs = np.random.RandomState(seed)
    h, w = ds_img_np.shape[:2]
    nx = (h - PATCH_SIZE) // STRIDE + 1 + int((h - PATCH_SIZE) % STRIDE > 0)
    ny = (w - PATCH_SIZE) // STRIDE + 1 + int((w - PATCH_SIZE) % STRIDE > 0)

    patches, boxes = [], []
    for x_idx in range(nx):
        start_x = x_idx * STRIDE
        for y_idx in range(ny):
            start_y = y_idx * STRIDE
            left = max(start_y - rs.randint(0, PATCH_SIZE // 4 + 1), 0)
            upper = max(start_x - rs.randint(0, PATCH_SIZE // 4 + 1), 0)
            right = min(start_y + PATCH_SIZE + rs.randint(0, PATCH_SIZE // 4 + 1), w)
            lower = min(start_x + PATCH_SIZE + rs.randint(0, PATCH_SIZE // 4 + 1), h)

            crop = ds_img_np[upper:lower, left:right, :]
            ri = (np.arange(PATCH_SIZE) * crop.shape[0]) // PATCH_SIZE
            ci = (np.arange(PATCH_SIZE) * crop.shape[1]) // PATCH_SIZE
            patch = crop[ri][:, ci]                     # (PATCH_SIZE, PATCH_SIZE, 3)
            patches.append(patch.reshape(-1).astype(np.float32))
            boxes.append((left, upper, right, lower))

    patches_np = np.stack(patches)                      # (P, 300)
    p_real = patches_np.shape[0]
    p_pad = max(MXU_K, ((p_real + MXU_K - 1) // MXU_K) * MXU_K)

    patches_pad = np.zeros((p_pad, D_PAD), np.float32)
    patches_pad[:p_real, :D_RAW] = patches_np
    bounds = np.zeros((4, p_pad), np.int32)             # padded cols: left==right==0
    bounds[:, :p_real] = np.array(boxes, dtype=np.int32).T
    return patches_pad, bounds, p_real


def _pick_tile_h(h, w):
    """Row tile so the scatter matmul M dim (tile_h * W) fills the 256-wide MXU
    (prefer multiples of 256 and >= 512, else multiples of 128) while keeping
    >= 4 row grid steps (>= 2 per TensorCore on v7x) so the output writeback
    pipelines, and capping M to bound the per-step mask/accumulator VMEM."""
    best_tile, best_key = 1, None
    for tile in range(1, h + 1):
        if h % tile:
            continue
        m = tile * w
        if tile > 1 and m > 2048:                 # bound per-step working set
            continue
        steps = h // tile
        key = (
            steps >= 4,                           # enough steps to pipeline / split
            m % 256 == 0 and m >= 512,            # fill v6e/v7x 256-wide MXU
            m % 128 == 0 and m >= 256,            # at least fill v5e 128-wide MXU
            min(m, 2048),                         # then prefer larger M
            -steps,                               # then fewer steps (less overhead)
        )
        if best_key is None or key > best_key:
            best_tile, best_key = tile, key
    return best_tile


def _pick_p_chunk(p_pad):
    """Patch chunk per reduction step: multiple of 256, divides P_PAD, <= 2048."""
    chunk = min(P_CHUNK_MAX, p_pad)
    while p_pad % chunk:
        chunk -= MXU_K
    return chunk


def run_kernel(patches_bf, w_bf, b, row_bounds, col_mask_bf, h, w_img,
               out_dtype=jnp.float32):
    """patches_bf (P_PAD, D_PAD) bf16, w_bf (D_PAD, F) bf16, b (1, F) f32,
    row_bounds (2, P_PAD) i32 = (upper, lower), col_mask_bf (W, P_PAD) bf16."""
    p_pad = patches_bf.shape[0]

    # ---- kernel A: encode all patches once (hoisted out of the tile loop) ----
    feats = pl.pallas_call(
        _encode_kernel,
        out_shape=jax.ShapeDtypeStruct((p_pad, FEAT_DIM), jnp.bfloat16),
        grid=(p_pad // P_TILE,),
        in_specs=[
            pl.BlockSpec((P_TILE, D_PAD), lambda i: (i, 0)),
            pl.BlockSpec((D_PAD, FEAT_DIM), lambda i: (0, 0)),
            pl.BlockSpec((1, FEAT_DIM), lambda i: (0, 0)),
        ],
        out_specs=pl.BlockSpec((P_TILE, FEAT_DIM), lambda i: (i, 0)),
        compiler_params=pltpu.CompilerParams(
            dimension_semantics=("parallel",)),
    )(patches_bf, w_bf, b)

    # ---- kernel B: (row-tile "parallel") x (patch-chunk "arbitrary") grid ----
    tile_h = _pick_tile_h(h, w_img)
    p_chunk = _pick_p_chunk(p_pad)
    # out_dtype=jnp.bfloat16 halves the HBM writeback if downstream tolerates it
    # (biggest relative win on v5e); default f32 matches the PyTorch output.
    out = pl.pallas_call(
        _scatter_avg_kernel,
        out_shape=jax.ShapeDtypeStruct((h, w_img, FEAT_DIM), out_dtype),
        grid=(h // tile_h, p_pad // p_chunk),
        in_specs=[
            pl.BlockSpec((p_chunk, FEAT_DIM), lambda i, p: (p, 0)),   # feats chunk
            pl.BlockSpec((2, p_chunk), lambda i, p: (0, p)),          # row bounds
            pl.BlockSpec((w_img, p_chunk), lambda i, p: (0, p)),      # col mask
        ],
        out_specs=pl.BlockSpec((tile_h, w_img, FEAT_DIM), lambda i, p: (i, 0, 0)),
        scratch_shapes=[
            pltpu.VMEM((tile_h * w_img, FEAT_DIM), jnp.float32),      # sum accum
            pltpu.VMEM((tile_h, w_img), jnp.float32),                 # count accum
        ],
        compiler_params=pltpu.CompilerParams(
            dimension_semantics=("parallel", "arbitrary")),
    )(feats, row_bounds, col_mask_bf)
    return out                                                        # (h, w, 512)


def reference(patches_f32, w_f32, b, bounds, p_real, h, w_img):
    """Pure-numpy replica of the PyTorch accumulation loop (f32 throughout)."""
    feats = patches_f32[:p_real] @ w_f32 + b                          # (P, F)
    sum_feature = np.zeros((FEAT_DIM, h, w_img), np.float32)
    count = np.zeros((1, h, w_img), np.float32)
    for i in range(p_real):
        left, upper, right, lower = bounds[:, i]
        sum_feature[:, upper:lower, left:right] += feats[i][:, None, None]
        count[:, upper:lower, left:right] += 1.0
    image_feature = sum_feature / np.maximum(count, 1.0)
    return image_feature.transpose(1, 2, 0)                          # (h, w, F)


if __name__ == "__main__":
    key = jax.random.PRNGKey(0)
    k_img, k_w, k_b = jax.random.split(key, 3)

    # Small synthetic "image": 128x128x3 -> downsampled to 16x16 (h=w=16).
    image = jax.random.uniform(k_img, (128, 128, 3), dtype=jnp.float32)
    w = jax.random.normal(k_w, (D_PAD, FEAT_DIM), dtype=jnp.float32) * 0.02
    b = jax.random.normal(k_b, (1, FEAT_DIM), dtype=jnp.float32) * 0.01

    h_full, w_full, c = image.shape
    h, w_ds = h_full // DOWN_SAMPLE, w_full // DOWN_SAMPLE

    # Downsample-by-8 (glue; stands in for PIL Image.resize).
    ds = image.reshape(h, DOWN_SAMPLE, w_ds, DOWN_SAMPLE, c).mean(axis=(1, 3))
    ds_np = np.asarray(jax.device_get(ds))

    patches_pad, bounds_np, p_real = build_patches_and_bounds(ds_np, seed=0)

    # bf16 MXU operands: quantized patches/weights; bounds split into row bounds
    # (in-kernel row mask) and a host-precomputed grid-invariant 0/1 column mask.
    patches_bf = jnp.asarray(patches_pad).astype(jnp.bfloat16)
    w_bf = w.astype(jnp.bfloat16)
    row_bounds = jnp.asarray(bounds_np[[1, 3], :])                   # (2, P_PAD)
    xs = np.arange(w_ds, dtype=np.int32)[:, None]                    # (W, 1)
    col_mask_np = (xs >= bounds_np[0:1, :]) & (xs < bounds_np[2:3, :])
    col_mask_bf = jnp.asarray(col_mask_np.astype(np.float32)).astype(jnp.bfloat16)

    out = run_kernel(patches_bf, w_bf, b, row_bounds, col_mask_bf, h, w_ds)
    out = jax.block_until_ready(out)

    # Reference uses the same bf16-quantized patches/weights so the comparison
    # isolates the kernel numerics: f32 MXU accumulation, the bf16 feats cast
    # before the scatter matmul, and the approximate EUP reciprocal.
    patches_q = np.asarray(jax.device_get(patches_bf.astype(jnp.float32)))
    w_q = np.asarray(jax.device_get(w_bf.astype(jnp.float32)))
    ref = reference(patches_q, w_q, np.asarray(jax.device_get(b)),
                    bounds_np, p_real, h, w_ds)

    np.testing.assert_allclose(np.asarray(out), ref, rtol=2e-2, atol=2e-3)
    print("KERNEL_OK")
</pallas_src>

<mosaic_0001>
module attributes {stable_mosaic.version = 11 : i64} {
  func.func @_encode_kernel(%arg0: i32, %arg1: memref<256x384xbf16, #tpu.memory_space<vmem>>, %arg2: memref<384x512xbf16, #tpu.memory_space<vmem>>, %arg3: memref<1x512xf32, #tpu.memory_space<vmem>>, %arg4: memref<256x512xbf16, #tpu.memory_space<vmem>>) attributes {dimension_semantics = [#tpu.dimension_semantics<parallel>], iteration_bounds = array<i64: 1>, scalar_prefetch = 0 : i64, scratch_operands = 0 : i64, tpu.core_type = #tpu.core_type<tc>, window_params = [{transform_indices = @transform_0, window_bounds = array<i64: 256, 384>}, {pipeline_mode = #tpu.pipeline_mode<synchronous>, transform_indices = @transform_1, window_bounds = array<i64: 384, 512>}, {pipeline_mode = #tpu.pipeline_mode<synchronous>, transform_indices = @transform_2, window_bounds = array<i64: 1, 512>}, {transform_indices = @transform_3, window_bounds = array<i64: 256, 512>}]} {
    %c0 = arith.constant 0 : index
    %c0_0 = arith.constant 0 : index
    %0 = vector.load %arg1[%c0, %c0_0] : memref<256x384xbf16, #tpu.memory_space<vmem>>, vector<256x384xbf16>
    %c0_1 = arith.constant 0 : index
    %c0_2 = arith.constant 0 : index
    %1 = vector.load %arg2[%c0_1, %c0_2] : memref<384x512xbf16, #tpu.memory_space<vmem>>, vector<384x512xbf16>
    %cst = arith.constant dense<0.000000e+00> : vector<256x512xf32>
    %2 = tpu.matmul %0, %1, %cst {dimension_numbers = #tpu.dot_dimension_numbers<[1], [0], [0], [1], [0, 0, 1, 1], [], []>} : vector<256x384xbf16>, vector<384x512xbf16>, vector<256x512xf32> -> vector<256x512xf32>
    %c0_3 = arith.constant 0 : index
    %c0_4 = arith.constant 0 : index
    %3 = vector.load %arg3[%c0_3, %c0_4] : memref<1x512xf32, #tpu.memory_space<vmem>>, vector<1x512xf32>
    %4 = vector.broadcast %3 : vector<1x512xf32> to vector<256x512xf32>
    %5 = arith.addf %2, %4 : vector<256x512xf32>
    %6 = arith.truncf %5 : vector<256x512xf32> to vector<256x512xbf16>
    %c0_5 = arith.constant 0 : index
    %c0_6 = arith.constant 0 : index
    %7 = vector.load %arg4[%c0_5, %c0_6] : memref<256x512xbf16, #tpu.memory_space<vmem>>, vector<256x512xbf16>
    tpu.vector_store %arg4[%c0_5, %c0_6], %6 {strides = array<i32>} : memref<256x512xbf16, #tpu.memory_space<vmem>>, vector<256x512xbf16>,
    return
  }
  func.func @transform_0(%arg0: i32) -> (i32, i32) {
    %c0_i32 = arith.constant 0 : i32
    %c0_i32_0 = arith.constant 0 : i32
    return %arg0, %c0_i32 : i32, i32
  }
  func.func @transform_1(%arg0: i32) -> (i32, i32) {
    %c0_i32 = arith.constant 0 : i32
    %c0_i32_0 = arith.constant 0 : i32
    %c0_i32_1 = arith.constant 0 : i32
    return %c0_i32, %c0_i32_0 : i32, i32
  }
  func.func @transform_2(%arg0: i32) -> (i32, i32) {
    %c0_i32 = arith.constant 0 : i32
    %c0_i32_0 = arith.constant 0 : i32
    %c0_i32_1 = arith.constant 0 : i32
    return %c0_i32, %c0_i32_0 : i32, i32
  }
  func.func @transform_3(%arg0: i32) -> (i32, i32) {
    %c0_i32 = arith.constant 0 : i32
    %c0_i32_0 = arith.constant 0 : i32
    return %arg0, %c0_i32 : i32, i32
  }
}

</mosaic_0001>

<llo_original>
// kernel: tpu_custom_call.1
$region0: #{tpu_custom_call.1}
  #allocation0 [shape = 'u32[]', space=smem, size = 0x4, offset = 0x4, fixed_abs, tag = 'smem constant byte address 0x4 - core index']
  #allocation1 [shape = 'u32[144,128]{1,0:T(1,128)}', space=vmem, size = 0x12000, scoped, tag = 'internal scratch']
  %s0 = inlined_call_operand.hbm [shape: bf16[256,384], index: 0, kind: input, shape index: {}]
  %s1 = inlined_call_operand.hbm [shape: bf16[384,512], index: 1, kind: input, shape index: {}]
  %s2 = inlined_call_operand.vmem [shape: f32[1,512], index: 2, kind: input, shape index: {}]
  %s3 = inlined_call_operand.hbm [shape: bf16[256,512], index: 3, kind: output, shape index: {}]
  %s4 = sld [smem:[#allocation0]]
  $region30: #{tpu_custom_call.1} parent=0
    _
  %s6 = ssub.s32 1, %s4
  %s7 = scalar_select 0, %s6, %s4
  $region1: #{tpu_custom_call.1} parent=0
    #allocation2 [shape = 'u8[196608]{0}', space=vmem, size = 0x30000, scoped, tag = 'input window, operand 0, single buffered']
    #allocation3 [shape = 's32[1]{0}', space=sflag, size = 0x4, scoped, tag = 'scoped memory for tpu_custom_call.1']
    #allocation4 [shape = 's32[1]{0}', space=sflag, size = 0x4, scoped, tag = 'scoped memory for tpu_custom_call.1']
    #allocation5 [shape = 'u8[393216]{0}', space=vmem, size = 0x60000, scoped, tag = 'input window, operand 1, single buffered']
    #allocation6 [shape = 's32[1]{0}', space=sflag, size = 0x4, scoped, tag = 'scoped memory for tpu_custom_call.1']
    #allocation7 [shape = 'u8[262144]{0}', space=vmem, size = 0x40000, scoped, tag = 'output window, operand 0, single buffered']
    %8 = vsyncpa [#allocation3], 0
    %9 = vsyncpa [#allocation6], 0
    %10 = vsyncpa [#allocation4], 0
    // Predicated region
    $region2: #{tpu_custom_call.1} parent=1 // pred_check
      _
    $region3: #{tpu_custom_call.1} parent=1 // pred_check_branch
      %12 = sbr.rel (0) target = $region5
    $region4: #{tpu_custom_call.1} parent=1 // pred_region
      %s14 = ssub.s32 6144, 6144
      %15 = vsyncadd [#allocation3], %s14
      %s16 = sshll.u32 [#allocation2], 4
      %s17 = int_to_ptr.vmem [resolvable:$true] %s16
      %22 = dma.hbm_to_vmem [thread:$0]  %s0, 6144, %s17, [#allocation3], 192, 192, 12
    $region5: #{tpu_custom_call.1} parent=1 // pred_fallthru
      _
    // Predicated region
    $region6: #{tpu_custom_call.1} parent=1 // pred_check
      _
    $region7: #{tpu_custom_call.1} parent=1 // pred_check_branch
      %24 = sbr.rel (0) target = $region9
    $region8: #{tpu_custom_call.1} parent=1 // pred_region
      %s26 = ssub.s32 12288, 12288
      %27 = vsyncadd [#allocation6], %s26
      %s28 = sshll.u32 [#allocation5], 4
      %s29 = int_to_ptr.vmem [resolvable:$true] %s28
      %34 = dma.hbm_to_vmem [thread:$0]  %s1, 12288, %s29, [#allocation6], 256, 256, 16
    $region9: #{tpu_custom_call.1} parent=1 // pred_fallthru
      _
    // Predicated region
    $region10: #{tpu_custom_call.1} parent=1 // pred_check
      _
    $region11: #{tpu_custom_call.1} parent=1 // pred_check_branch
      %36 = sbr.rel (0) target = $region13
    $region12: #{tpu_custom_call.1} parent=1 // pred_region
      _
    $region13: #{tpu_custom_call.1} parent=1 // pred_fallthru
      _
    // Predicated region
    $region14: #{tpu_custom_call.1} parent=1 // pred_check
      _
    $region15: #{tpu_custom_call.1} parent=1 // pred_check_branch
      %38 = sbr.rel (0) target = $region17
    $region16: #{tpu_custom_call.1} parent=1 // pred_region
      %39 = dma.done [#allocation3], 6144
    $region17: #{tpu_custom_call.1} parent=1 // pred_fallthru
      _
    // Predicated region
    $region18: #{tpu_custom_call.1} parent=1 // pred_check
      _
    $region19: #{tpu_custom_call.1} parent=1 // pred_check_branch
      %41 = sbr.rel (0) target = $region21
    $region20: #{tpu_custom_call.1} parent=1 // pred_region
      %42 = dma.done [#allocation6], 12288
    $region21: #{tpu_custom_call.1} parent=1 // pred_fallthru
      _
    %v44 = vld [vmem:[#allocation2] sm:$0xff]
    %v45 = vld [vmem:[#allocation2 + $0x8] sm:$0xf]
    %v46 = vld [vmem:[#allocation2 + $0xc] sm:$0xff]
    %v47 = vld [vmem:[#allocation2 + $0x14] sm:$0xf]
    %v48 = vld [vmem:[#allocation2 + $0x18] sm:$0xff]
    %v49 = vld [vmem:[#allocation2 + $0x20] sm:$0xf]
    %v50 = vld [vmem:[#allocation2 + $0x24] sm:$0xff]
    %v51 = vld [vmem:[#allocation2 + $0x2c] sm:$0xf]
    %v52 = vld [vmem:[#allocation2 + $0x30] sm:$0xff]
    %v53 = vld [vmem:[#allocation2 + $0x38] sm:$0xf]
    %v54 = vld [vmem:[#allocation2 + $0x3c] sm:$0xff]
    %v55 = vld [vmem:[#allocation2 + $0x44] sm:$0xf]
    %v56 = vld [vmem:[#allocation2 + $0x48] sm:$0xff]
    %v57 = vld [vmem:[#allocation2 + $0x50] sm:$0xf]
    %v58 = vld [vmem:[#allocation2 + $0x54] sm:$0xff]
    %v59 = vld [vmem:[#allocation2 + $0x5c] sm:$0xf]
    %v60 = vld [vmem:[#allocation2 + $0x60] sm:$0xff]
    %v61 = vld [vmem:[#allocation2 + $0x68] sm:$0xf]
    %v62 = vld [vmem:[#allocation2 + $0x6c] sm:$0xff]
    %v63 = vld [vmem:[#allocation2 + $0x74] sm:$0xf]
    %v64 = vld [vmem:[#allocation2 + $0x78] sm:$0xff]
    %v65 = vld [vmem:[#allocation2 + $0x80] sm:$0xf]
    %v66 = vld [vmem:[#allocation2 + $0x84] sm:$0xff]
    %v67 = vld [vmem:[#allocation2 + $0x8c] sm:$0xf]
    %v68 = vld [vmem:[#allocation2 + $0x90] sm:$0xff]
    %v69 = vld [vmem:[#allocation2 + $0x98] sm:$0xf]
    %v70 = vld [vmem:[#allocation2 + $0x9c] sm:$0xff]
    %v71 = vld [vmem:[#allocation2 + $0xa4] sm:$0xf]
    %v72 = vld [vmem:[#allocation2 + $0xa8] sm:$0xff]
    %v73 = vld [vmem:[#allocation2 + $0xb0] sm:$0xf]
    %v74 = vld [vmem:[#allocation2 + $0xb4] sm:$0xff]
    %v75 = vld [vmem:[#allocation2 + $0xbc] sm:$0xf]
    %v76 = vld [vmem:[#allocation2 + $0xc0] sm:$0xff]
    %v77 = vld [vmem:[#allocation2 + $0xc8] sm:$0xf]
    %v78 = vld [vmem:[#allocation2 + $0xcc] sm:$0xff]
    %v79 = vld [vmem:[#allocation2 + $0xd4] sm:$0xf]
    %v80 = vld [vmem:[#allocation2 + $0xd8] sm:$0xff]
    %v81 = vld [vmem:[#allocation2 + $0xe0] sm:$0xf]
    %v82 = vld [vmem:[#allocation2 + $0xe4] sm:$0xff]
    %v83 = vld [vmem:[#allocation2 + $0xec] sm:$0xf]
    %v84 = vld [vmem:[#allocation2 + $0xf0] sm:$0xff]
    %v85 = vld [vmem:[#allocation2 + $0xf8] sm:$0xf]
    %v86 = vld [vmem:[#allocation2 + $0xfc] sm:$0xff]
    %v87 = vld [vmem:[#allocation2 + $0x104] sm:$0xf]
    %v88 = vld [vmem:[#allocation2 + $0x108] sm:$0xff]
    %v89 = vld [vmem:[#allocation2 + $0x110] sm:$0xf]
    %v90 = vld [vmem:[#allocation2 + $0x114] sm:$0xff]
    %v91 = vld [vmem:[#allocation2 + $0x11c] sm:$0xf]
    %v92 = vld [vmem:[#allocation2 + $0x120] sm:$0xff]
    %v93 = vld [vmem:[#allocation2 + $0x128] sm:$0xf]
    %v94 = vld [vmem:[#allocation2 + $0x12c] sm:$0xff]
    %v95 = vld [vmem:[#allocation2 + $0x134] sm:$0xf]
    %v96 = vld [vmem:[#allocation2 + $0x138] sm:$0xff]
    %v97 = vld [vmem:[#allocation2 + $0x140] sm:$0xf]
    %v98 = vld [vmem:[#allocation2 + $0x144] sm:$0xff]
    %v99 = vld [vmem:[#allocation2 + $0x14c] sm:$0xf]
    %v100 = vld [vmem:[#allocation2 + $0x150] sm:$0xff]
    %v101 = vld [vmem:[#allocation2 + $0x158] sm:$0xf]
    %v102 = vld [vmem:[#allocation2 + $0x15c] sm:$0xff]
    %v103 = vld [vmem:[#allocation2 + $0x164] sm:$0xf]
    %v104 = vld [vmem:[#allocation2 + $0x168] sm:$0xff]
    %v105 = vld [vmem:[#allocation2 + $0x170] sm:$0xf]
    %v106 = vld [vmem:[#allocation2 + $0x174] sm:$0xff]
    %v107 = vld [vmem:[#allocation2 + $0x17c] sm:$0xf]
    %v108 = vld [vmem:[#allocation5] sm:$0xff]
    %v109 = vld [vmem:[#allocation5 + $0x8] sm:$0xff]
    %v110 = vld [vmem:[#allocation5 + $0x10] sm:$0xff]
    %v111 = vld [vmem:[#allocation5 + $0x18] sm:$0xff]
    %v112 = vld [vmem:[#allocation5 + $0x20] sm:$0xff]
    %v113 = vld [vmem:[#allocation5 + $0x28] sm:$0xff]
    %v114 = vld [vmem:[#allocation5 + $0x30] sm:$0xff]
    %v115 = vld [vmem:[#allocation5 + $0x38] sm:$0xff]
    %v116 = vld [vmem:[#allocation5 + $0x40] sm:$0xff]
    %v117 = vld [vmem:[#allocation5 + $0x48] sm:$0xff]
    %v118 = vld [vmem:[#allocation5 + $0x50] sm:$0xff]
    %v119 = vld [vmem:[#allocation5 + $0x58] sm:$0xff]
    %v120 = vld [vmem:[#allocation5 + $0x60] sm:$0xff]
    %v121 = vld [vmem:[#allocation5 + $0x68] sm:$0xff]
    %v122 = vld [vmem:[#allocation5 + $0x70] sm:$0xff]
    %v123 = vld [vmem:[#allocation5 + $0x78] sm:$0xff]
    %v124 = vld [vmem:[#allocation5 + $0x80] sm:$0xff]
    %v125 = vld [vmem:[#allocation5 + $0x88] sm:$0xff]
    %v126 = vld [vmem:[#allocation5 + $0x90] sm:$0xff]
    %v127 = vld [vmem:[#allocation5 + $0x98] sm:$0xff]
    %v128 = vld [vmem:[#allocation5 + $0xa0] sm:$0xff]
    %v129 = vld [vmem:[#allocation5 + $0xa8] sm:$0xff]
    %v130 = vld [vmem:[#allocation5 + $0xb0] sm:$0xff]
    %v131 = vld [vmem:[#allocation5 + $0xb8] sm:$0xff]
    %v132 = vld [vmem:[#allocation5 + $0xc0] sm:$0xff]
    %v133 = vld [vmem:[#allocation5 + $0xc8] sm:$0xff]
    %v134 = vld [vmem:[#allocation5 + $0xd0] sm:$0xff]
    %v135 = vld [vmem:[#allocation5 + $0xd8] sm:$0xff]
    %v136 = vld [vmem:[#allocation5 + $0xe0] sm:$0xff]
    %v137 = vld [vmem:[#allocation5 + $0xe8] sm:$0xff]
    %v138 = vld [vmem:[#allocation5 + $0xf0] sm:$0xff]
    %v139 = vld [vmem:[#allocation5 + $0xf8] sm:$0xff]
    %v140 = vld [vmem:[#allocation5 + $0x100] sm:$0xff]
    %v141 = vld [vmem:[#allocation5 + $0x108] sm:$0xff]
    %v142 = vld [vmem:[#allocation5 + $0x110] sm:$0xff]
    %v143 = vld [vmem:[#allocation5 + $0x118] sm:$0xff]
    %v144 = vld [vmem:[#allocation5 + $0x120] sm:$0xff]
    %v145 = vld [vmem:[#allocation5 + $0x128] sm:$0xff]
    %v146 = vld [vmem:[#allocation5 + $0x130] sm:$0xff]
    %v147 = vld [vmem:[#allocation5 + $0x138] sm:$0xff]
    %v148 = vld [vmem:[#allocation5 + $0x140] sm:$0xff]
    %v149 = vld [vmem:[#allocation5 + $0x148] sm:$0xff]
    %v150 = vld [vmem:[#allocation5 + $0x150] sm:$0xff]
    %v151 = vld [vmem:[#allocation5 + $0x158] sm:$0xff]
    %v152 = vld [vmem:[#allocation5 + $0x160] sm:$0xff]
    %v153 = vld [vmem:[#allocation5 + $0x168] sm:$0xff]
    %v154 = vld [vmem:[#allocation5 + $0x170] sm:$0xff]
    %v155 = vld [vmem:[#allocation5 + $0x178] sm:$0xff]
    %v156 = vld [vmem:[#allocation5 + $0x180] sm:$0xff]
    %v157 = vld [vmem:[#allocation5 + $0x188] sm:$0xff]
    %v158 = vld [vmem:[#allocation5 + $0x190] sm:$0xff]
    %v159 = vld [vmem:[#allocation5 + $0x198] sm:$0xff]
    %v160 = vld [vmem:[#allocation5 + $0x1a0] sm:$0xff]
    %v161 = vld [vmem:[#allocation5 + $0x1a8] sm:$0xff]
    %v162 = vld [vmem:[#allocation5 + $0x1b0] sm:$0xff]
    %v163 = vld [vmem:[#allocation5 + $0x1b8] sm:$0xff]
    %v164 = vld [vmem:[#allocation5 + $0x1c0] sm:$0xff]
    %v165 = vld [vmem:[#allocation5 + $0x1c8] sm:$0xff]
    %v166 = vld [vmem:[#allocation5 + $0x1d0] sm:$0xff]
    %v167 = vld [vmem:[#allocation5 + $0x1d8] sm:$0xff]
    %v168 = vld [vmem:[#allocation5 + $0x1e0] sm:$0xff]
    %v169 = vld [vmem:[#allocation5 + $0x1e8] sm:$0xff]
    %v170 = vld [vmem:[#allocation5 + $0x1f0] sm:$0xff]
    %v171 = vld [vmem:[#allocation5 + $0x1f8] sm:$0xff]
    %v172 = vld [vmem:[#allocation5 + $0x200] sm:$0xff]
    %v173 = vld [vmem:[#allocation5 + $0x208] sm:$0xff]
    %v174 = vld [vmem:[#allocation5 + $0x210] sm:$0xff]
    %v175 = vld [vmem:[#allocation5 + $0x218] sm:$0xff]
    %v176 = vld [vmem:[#allocation5 + $0x220] sm:$0xff]
    %v177 = vld [vmem:[#allocation5 + $0x228] sm:$0xff]
    %v178 = vld [vmem:[#allocation5 + $0x230] sm:$0xff]
    %v179 = vld [vmem:[#allocation5 + $0x238] sm:$0xff]
    %v180 = vld [vmem:[#allocation5 + $0x240] sm:$0xff]
    %v181 = vld [vmem:[#allocation5 + $0x248] sm:$0xff]
    %v182 = vld [vmem:[#allocation5 + $0x250] sm:$0xff]
    %v183 = vld [vmem:[#allocation5 + $0x258] sm:$0xff]
    %v184 = vld [vmem:[#allocation5 + $0x260] sm:$0xff]
    %v185 = vld [vmem:[#allocation5 + $0x268] sm:$0xff]
    %v186 = vld [vmem:[#allocation5 + $0x270] sm:$0xff]
    %v187 = vld [vmem:[#allocation5 + $0x278] sm:$0xff]
    %v188 = vld [vmem:[#allocation5 + $0x280] sm:$0xff]
    %v189 = vld [vmem:[#allocation5 + $0x288] sm:$0xff]
    %v190 = vld [vmem:[#allocation5 + $0x290] sm:$0xff]
    %v191 = vld [vmem:[#allocation5 + $0x298] sm:$0xff]
    %v192 = vld [vmem:[#allocation5 + $0x2a0] sm:$0xff]
    %v193 = vld [vmem:[#allocation5 + $0x2a8] sm:$0xff]
    %v194 = vld [vmem:[#allocation5 + $0x2b0] sm:$0xff]
    %v195 = vld [vmem:[#allocation5 + $0x2b8] sm:$0xff]
    %v196 = vld [vmem:[#allocation5 + $0x2c0] sm:$0xff]
    %v197 = vld [vmem:[#allocation5 + $0x2c8] sm:$0xff]
    %v198 = vld [vmem:[#allocation5 + $0x2d0] sm:$0xff]
    %v199 = vld [vmem:[#allocation5 + $0x2d8] sm:$0xff]
    %v200 = vld [vmem:[#allocation5 + $0x2e0] sm:$0xff]
    %v201 = vld [vmem:[#allocation5 + $0x2e8] sm:$0xff]
    %v202 = vld [vmem:[#allocation5 + $0x2f0] sm:$0xff]
    %v203 = vld [vmem:[#allocation5 + $0x2f8] sm:$0xff]
    %v204 = vld [vmem:[%s2] sm:$0xf]
    %v206 = vlaneseq
    %v207 = vshrl.u32 %v206, 7
    %v208 = vsub.s32 0, %v207
    %v209 = vrot.slane %v204, %v208
    %v210 = vlaneseq
    %v211 = vshrl.u32 %v210, 7
    %v212 = vsub.s32 1, %v211
    %v213 = vrot.slane %v204, %v212
    %v214 = vlaneseq
    %v215 = vshrl.u32 %v214, 7
    %v216 = vsub.s32 2, %v215
    %v217 = vrot.slane %v204, %v216
    %v218 = vlaneseq
    %v219 = vshrl.u32 %v218, 7
    %v220 = vsub.s32 3, %v219
    %v221 = vrot.slane %v204, %v220
    %v290 = vunpack.c.l.b16 %v44
    %v291 = vunpack.c.h.b16 %v44
    %v292 = vunpack.c.l.b16 %v45
    %v293 = vunpack.c.l.b16 %v46
    %v294 = vunpack.c.h.b16 %v46
    %v295 = vunpack.c.l.b16 %v47
    %v296 = vunpack.c.l.b16 %v48
    %v297 = vunpack.c.h.b16 %v48
    %v298 = vunpack.c.l.b16 %v49
    %v299 = vunpack.c.l.b16 %v50
    %v300 = vunpack.c.h.b16 %v50
    %v301 = vunpack.c.l.b16 %v51
    %v302 = vunpack.c.l.b16 %v52
    %v303 = vunpack.c.h.b16 %v52
    %v304 = vunpack.c.l.b16 %v53
    %v305 = vunpack.c.l.b16 %v54
    %v306 = vunpack.c.h.b16 %v54
    %v307 = vunpack.c.l.b16 %v55
    %v308 = vunpack.c.l.b16 %v56
    %v309 = vunpack.c.h.b16 %v56
    %v310 = vunpack.c.l.b16 %v57
    %v311 = vunpack.c.l.b16 %v58
    %v312 = vunpack.c.h.b16 %v58
    %v313 = vunpack.c.l.b16 %v59
    %v314 = vunpack.c.l.b16 %v60
    %v315 = vunpack.c.h.b16 %v60
    %v316 = vunpack.c.l.b16 %v61
    %v317 = vunpack.c.l.b16 %v62
    %v318 = vunpack.c.h.b16 %v62
    %v319 = vunpack.c.l.b16 %v63
    %v320 = vunpack.c.l.b16 %v64
    %v321 = vunpack.c.h.b16 %v64
    %v322 = vunpack.c.l.b16 %v65
    %v323 = vunpack.c.l.b16 %v66
    %v324 = vunpack.c.h.b16 %v66
    %v325 = vunpack.c.l.b16 %v67
    %v326 = vunpack.c.l.b16 %v68
    %v327 = vunpack.c.h.b16 %v68
    %v328 = vunpack.c.l.b16 %v69
    %v329 = vunpack.c.l.b16 %v70
    %v330 = vunpack.c.h.b16 %v70
    %v331 = vunpack.c.l.b16 %v71
    %v332 = vunpack.c.l.b16 %v72
    %v333 = vunpack.c.h.b16 %v72
    %v334 = vunpack.c.l.b16 %v73
    %v335 = vunpack.c.l.b16 %v74
    %v336 = vunpack.c.h.b16 %v74
    %v337 = vunpack.c.l.b16 %v75
    %v338 = vunpack.c.l.b16 %v76
    %v339 = vunpack.c.h.b16 %v76
    %v340 = vunpack.c.l.b16 %v77
    %v341 = vunpack.c.l.b16 %v78
    %v342 = vunpack.c.h.b16 %v78
    %v343 = vunpack.c.l.b16 %v79
    %v344 = vunpack.c.l.b16 %v80
    %v345 = vunpack.c.h.b16 %v80
    %v346 = vunpack.c.l.b16 %v81
    %v347 = vunpack.c.l.b16 %v82
    %v348 = vunpack.c.h.b16 %v82
    %v349 = vunpack.c.l.b16 %v83
    %v350 = vunpack.c.l.b16 %v84
    %v351 = vunpack.c.h.b16 %v84
    %v352 = vunpack.c.l.b16 %v85
    %v353 = vunpack.c.l.b16 %v86
    %v354 = vunpack.c.h.b16 %v86
    %v355 = vunpack.c.l.b16 %v87
    %v356 = vunpack.c.l.b16 %v88
    %v357 = vunpack.c.h.b16 %v88
    %v358 = vunpack.c.l.b16 %v89
    %v359 = vunpack.c.l.b16 %v90
    %v360 = vunpack.c.h.b16 %v90
    %v361 = vunpack.c.l.b16 %v91
    %v362 = vunpack.c.l.b16 %v92
    %v363 = vunpack.c.h.b16 %v92
    %v364 = vunpack.c.l.b16 %v93
    %v365 = vunpack.c.l.b16 %v94
    %v366 = vunpack.c.h.b16 %v94
    %v367 = vunpack.c.l.b16 %v95
    %v368 = vunpack.c.l.b16 %v96
    %v369 = vunpack.c.h.b16 %v96
    %v370 = vunpack.c.l.b16 %v97
    %v371 = vunpack.c.l.b16 %v98
    %v372 = vunpack.c.h.b16 %v98
    %v373 = vunpack.c.l.b16 %v99
    %v374 = vunpack.c.l.b16 %v100
    %v375 = vunpack.c.h.b16 %v100
    %v376 = vunpack.c.l.b16 %v101
    %v377 = vunpack.c.l.b16 %v102
    %v378 = vunpack.c.h.b16 %v102
    %v379 = vunpack.c.l.b16 %v103
    %v380 = vunpack.c.l.b16 %v104
    %v381 = vunpack.c.h.b16 %v104
    %v382 = vunpack.c.l.b16 %v105
    %v383 = vunpack.c.l.b16 %v106
    %v384 = vunpack.c.h.b16 %v106
    %v385 = vunpack.c.l.b16 %v107
    %v386 = vpack.c.b16 %v293, %v290
    %v387 = vpack.c.b16 %v294, %v291
    %v388 = vpack.c.b16 %v295, %v292
    %v389 = vpack.c.b16 %v299, %v296
    %v390 = vpack.c.b16 %v300, %v297
    %v391 = vpack.c.b16 %v301, %v298
    %v392 = vpack.c.b16 %v305, %v302
    %v393 = vpack.c.b16 %v306, %v303
    %v394 = vpack.c.b16 %v307, %v304
    %v395 = vpack.c.b16 %v311, %v308
    %v396 = vpack.c.b16 %v312, %v309
    %v397 = vpack.c.b16 %v313, %v310
    %v398 = vpack.c.b16 %v317, %v314
    %v399 = vpack.c.b16 %v318, %v315
    %v400 = vpack.c.b16 %v319, %v316
    %v401 = vpack.c.b16 %v323, %v320
    %v402 = vpack.c.b16 %v324, %v321
    %v403 = vpack.c.b16 %v325, %v322
    %v404 = vpack.c.b16 %v329, %v326
    %v405 = vpack.c.b16 %v330, %v327
    %v406 = vpack.c.b16 %v331, %v328
    %v407 = vpack.c.b16 %v335, %v332
    %v408 = vpack.c.b16 %v336, %v333
    %v409 = vpack.c.b16 %v337, %v334
    %v410 = vpack.c.b16 %v341, %v338
    %v411 = vpack.c.b16 %v342, %v339
    %v412 = vpack.c.b16 %v343, %v340
    %v413 = vpack.c.b16 %v347, %v344
    %v414 = vpack.c.b16 %v348, %v345
    %v415 = vpack.c.b16 %v349, %v346
    %v416 = vpack.c.b16 %v353, %v350
    %v417 = vpack.c.b16 %v354, %v351
    %v418 = vpack.c.b16 %v355, %v352
    %v419 = vpack.c.b16 %v359, %v356
    %v420 = vpack.c.b16 %v360, %v357
    %v421 = vpack.c.b16 %v361, %v358
    %v422 = vpack.c.b16 %v365, %v362
    %v423 = vpack.c.b16 %v366, %v363
    %v424 = vpack.c.b16 %v367, %v364
    %v425 = vpack.c.b16 %v371, %v368
    %v426 = vpack.c.b16 %v372, %v369
    %v427 = vpack.c.b16 %v373, %v370
    %v428 = vpack.c.b16 %v377, %v374
    %v429 = vpack.c.b16 %v378, %v375
    %v430 = vpack.c.b16 %v379, %v376
    %v431 = vpack.c.b16 %v383, %v380
    %v432 = vpack.c.b16 %v384, %v381
    %v433 = vpack.c.b16 %v385, %v382
    %v578 = vunpack.c.l.b16 %v108
    %v579 = vunpack.c.h.b16 %v108
    %v580 = vunpack.c.l.b16 %v109
    %v581 = vunpack.c.h.b16 %v109
    %v582 = vunpack.c.l.b16 %v110
    %v583 = vunpack.c.h.b16 %v110
    %v584 = vunpack.c.l.b16 %v111
    %v585 = vunpack.c.h.b16 %v111
    %v586 = vunpack.c.l.b16 %v112
    %v587 = vunpack.c.h.b16 %v112
    %v588 = vunpack.c.l.b16 %v113
    %v589 = vunpack.c.h.b16 %v113
    %v590 = vunpack.c.l.b16 %v114
    %v591 = vunpack.c.h.b16 %v114
    %v592 = vunpack.c.l.b16 %v115
    %v593 = vunpack.c.h.b16 %v115
    %v594 = vunpack.c.l.b16 %v116
    %v595 = vunpack.c.h.b16 %v116
    %v596 = vunpack.c.l.b16 %v117
    %v597 = vunpack.c.h.b16 %v117
    %v598 = vunpack.c.l.b16 %v118
    %v599 = vunpack.c.h.b16 %v118
    %v600 = vunpack.c.l.b16 %v119
    %v601 = vunpack.c.h.b16 %v119
    %v602 = vunpack.c.l.b16 %v120
    %v603 = vunpack.c.h.b16 %v120
    %v604 = vunpack.c.l.b16 %v121
    %v605 = vunpack.c.h.b16 %v121
    %v606 = vunpack.c.l.b16 %v122
    %v607 = vunpack.c.h.b16 %v122
    %v608 = vunpack.c.l.b16 %v123
    %v609 = vunpack.c.h.b16 %v123
    %v610 = vunpack.c.l.b16 %v124
    %v611 = vunpack.c.h.b16 %v124
    %v612 = vunpack.c.l.b16 %v125
    %v613 = vunpack.c.h.b16 %v125
    %v614 = vunpack.c.l.b16 %v126
    %v615 = vunpack.c.h.b16 %v126
    %v616 = vunpack.c.l.b16 %v127
    %v617 = vunpack.c.h.b16 %v127
    %v618 = vunpack.c.l.b16 %v128
    %v619 = vunpack.c.h.b16 %v128
    %v620 = vunpack.c.l.b16 %v129
    %v621 = vunpack.c.h.b16 %v129
    %v622 = vunpack.c.l.b16 %v130
    %v623 = vunpack.c.h.b16 %v130
    %v624 = vunpack.c.l.b16 %v131
    %v625 = vunpack.c.h.b16 %v131
    %v626 = vunpack.c.l.b16 %v132
    %v627 = vunpack.c.h.b16 %v132
    %v628 = vunpack.c.l.b16 %v133
    %v629 = vunpack.c.h.b16 %v133
    %v630 = vunpack.c.l.b16 %v134
    %v631 = vunpack.c.h.b16 %v134
    %v632 = vunpack.c.l.b16 %v135
    %v633 = vunpack.c.h.b16 %v135
    %v634 = vunpack.c.l.b16 %v136
    %v635 = vunpack.c.h.b16 %v136
    %v636 = vunpack.c.l.b16 %v137
    %v637 = vunpack.c.h.b16 %v137
    %v638 = vunpack.c.l.b16 %v138
    %v639 = vunpack.c.h.b16 %v138
    %v640 = vunpack.c.l.b16 %v139
    %v641 = vunpack.c.h.b16 %v139
    %v642 = vunpack.c.l.b16 %v140
    %v643 = vunpack.c.h.b16 %v140
    %v644 = vunpack.c.l.b16 %v141
    %v645 = vunpack.c.h.b16 %v141
    %v646 = vunpack.c.l.b16 %v142
    %v647 = vunpack.c.h.b16 %v142
    %v648 = vunpack.c.l.b16 %v143
    %v649 = vunpack.c.h.b16 %v143
    %v650 = vunpack.c.l.b16 %v144
    %v651 = vunpack.c.h.b16 %v144
    %v652 = vunpack.c.l.b16 %v145
    %v653 = vunpack.c.h.b16 %v145
    %v654 = vunpack.c.l.b16 %v146
    %v655 = vunpack.c.h.b16 %v146
    %v656 = vunpack.c.l.b16 %v147
    %v657 = vunpack.c.h.b16 %v147
    %v658 = vunpack.c.l.b16 %v148
    %v659 = vunpack.c.h.b16 %v148
    %v660 = vunpack.c.l.b16 %v149
    %v661 = vunpack.c.h.b16 %v149
    %v662 = vunpack.c.l.b16 %v150
    %v663 = vunpack.c.h.b16 %v150
    %v664 = vunpack.c.l.b16 %v151
    %v665 = vunpack.c.h.b16 %v151
    %v666 = vunpack.c.l.b16 %v152
    %v667 = vunpack.c.h.b16 %v152
    %v668 = vunpack.c.l.b16 %v153
    %v669 = vunpack.c.h.b16 %v153
    %v670 = vunpack.c.l.b16 %v154
    %v671 = vunpack.c.h.b16 %v154
    %v672 = vunpack.c.l.b16 %v155
    %v673 = vunpack.c.h.b16 %v155
    %v674 = vunpack.c.l.b16 %v156
    %v675 = vunpack.c.h.b16 %v156
    %v676 = vunpack.c.l.b16 %v157
    %v677 = vunpack.c.h.b16 %v157
    %v678 = vunpack.c.l.b16 %v158
    %v679 = vunpack.c.h.b16 %v158
    %v680 = vunpack.c.l.b16 %v159
    %v681 = vunpack.c.h.b16 %v159
    %v682 = vunpack.c.l.b16 %v160
    %v683 = vunpack.c.h.b16 %v160
    %v684 = vunpack.c.l.b16 %v161
    %v685 = vunpack.c.h.b16 %v161
    %v686 = vunpack.c.l.b16 %v162
    %v687 = vunpack.c.h.b16 %v162
    %v688 = vunpack.c.l.b16 %v163
    %v689 = vunpack.c.h.b16 %v163
    %v690 = vunpack.c.l.b16 %v164
    %v691 = vunpack.c.h.b16 %v164
    %v692 = vunpack.c.l.b16 %v165
    %v693 = vunpack.c.h.b16 %v165
    %v694 = vunpack.c.l.b16 %v166
    %v695 = vunpack.c.h.b16 %v166
    %v696 = vunpack.c.l.b16 %v167
    %v697 = vunpack.c.h.b16 %v167
    %v698 = vunpack.c.l.b16 %v168
    %v699 = vunpack.c.h.b16 %v168
    %v700 = vunpack.c.l.b16 %v169
    %v701 = vunpack.c.h.b16 %v169
    %v702 = vunpack.c.l.b16 %v170
    %v703 = vunpack.c.h.b16 %v170
    %v704 = vunpack.c.l.b16 %v171
    %v705 = vunpack.c.h.b16 %v171
    %v706 = vunpack.c.l.b16 %v172
    %v707 = vunpack.c.h.b16 %v172
    %v708 = vunpack.c.l.b16 %v173
    %v709 = vunpack.c.h.b16 %v173
    %v710 = vunpack.c.l.b16 %v174
    %v711 = vunpack.c.h.b16 %v174
    %v712 = vunpack.c.l.b16 %v175
    %v713 = vunpack.c.h.b16 %v175
    %v714 = vunpack.c.l.b16 %v176
    %v715 = vunpack.c.h.b16 %v176
    %v716 = vunpack.c.l.b16 %v177
    %v717 = vunpack.c.h.b16 %v177
    %v718 = vunpack.c.l.b16 %v178
    %v719 = vunpack.c.h.b16 %v178
    %v720 = vunpack.c.l.b16 %v179
    %v721 = vunpack.c.h.b16 %v179
    %v722 = vunpack.c.l.b16 %v180
    %v723 = vunpack.c.h.b16 %v180
    %v724 = vunpack.c.l.b16 %v181
    %v725 = vunpack.c.h.b16 %v181
    %v726 = vunpack.c.l.b16 %v182
    %v727 = vunpack.c.h.b16 %v182
    %v728 = vunpack.c.l.b16 %v183
    %v729 = vunpack.c.h.b16 %v183
    %v730 = vunpack.c.l.b16 %v184
    %v731 = vunpack.c.h.b16 %v184
    %v732 = vunpack.c.l.b16 %v185
    %v733 = vunpack.c.h.b16 %v185
    %v734 = vunpack.c.l.b16 %v186
    %v735 = vunpack.c.h.b16 %v186
    %v736 = vunpack.c.l.b16 %v187
    %v737 = vunpack.c.h.b16 %v187
    %v738 = vunpack.c.l.b16 %v188
    %v739 = vunpack.c.h.b16 %v188
    %v740 = vunpack.c.l.b16 %v189
    %v741 = vunpack.c.h.b16 %v189
    %v742 = vunpack.c.l.b16 %v190
    %v743 = vunpack.c.h.b16 %v190
    %v744 = vunpack.c.l.b16 %v191
    %v745 = vunpack.c.h.b16 %v191
    %v746 = vunpack.c.l.b16 %v192
    %v747 = vunpack.c.h.b16 %v192
    %v748 = vunpack.c.l.b16 %v193
    %v749 = vunpack.c.h.b16 %v193
    %v750 = vunpack.c.l.b16 %v194
    %v751 = vunpack.c.h.b16 %v194
    %v752 = vunpack.c.l.b16 %v195
    %v753 = vunpack.c.h.b16 %v195
    %v754 = vunpack.c.l.b16 %v196
    %v755 = vunpack.c.h.b16 %v196
    %v756 = vunpack.c.l.b16 %v197
    %v757 = vunpack.c.h.b16 %v197
    %v758 = vunpack.c.l.b16 %v198
    %v759 = vunpack.c.h.b16 %v198
    %v760 = vunpack.c.l.b16 %v199
    %v761 = vunpack.c.h.b16 %v199
    %v762 = vunpack.c.l.b16 %v200
    %v763 = vunpack.c.h.b16 %v200
    %v764 = vunpack.c.l.b16 %v201
    %v765 = vunpack.c.h.b16 %v201
    %v766 = vunpack.c.l.b16 %v202
    %v767 = vunpack.c.h.b16 %v202
    %v768 = vunpack.c.l.b16 %v203
    %v769 = vunpack.c.h.b16 %v203
    %v770 = vpack.c.b16 %v582, %v578
    %v771 = vpack.c.b16 %v583, %v579
    %v772 = vpack.c.b16 %v584, %v580
    %v773 = vpack.c.b16 %v585, %v581
    %v774 = vpack.c.b16 %v590, %v586
    %v775 = vpack.c.b16 %v591, %v587
    %v776 = vpack.c.b16 %v592, %v588
    %v777 = vpack.c.b16 %v593, %v589
    %v778 = vpack.c.b16 %v598, %v594
    %v779 = vpack.c.b16 %v599, %v595
    %v780 = vpack.c.b16 %v600, %v596
    %v781 = vpack.c.b16 %v601, %v597
    %v782 = vpack.c.b16 %v606, %v602
    %v783 = vpack.c.b16 %v607, %v603
    %v784 = vpack.c.b16 %v608, %v604
    %v785 = vpack.c.b16 %v609, %v605
    %v786 = vpack.c.b16 %v614, %v610
    %v787 = vpack.c.b16 %v615, %v611
    %v788 = vpack.c.b16 %v616, %v612
    %v789 = vpack.c.b16 %v617, %v613
    %v790 = vpack.c.b16 %v622, %v618
    %v791 = vpack.c.b16 %v623, %v619
    %v792 = vpack.c.b16 %v624, %v620
    %v793 = vpack.c.b16 %v625, %v621
    %v794 = vpack.c.b16 %v630, %v626
    %v795 = vpack.c.b16 %v631, %v627
    %v796 = vpack.c.b16 %v632, %v628
    %v797 = vpack.c.b16 %v633, %v629
    %v798 = vpack.c.b16 %v638, %v634
    %v799 = vpack.c.b16 %v639, %v635
    %v800 = vpack.c.b16 %v640, %v636
    %v801 = vpack.c.b16 %v641, %v637
    %v802 = vpack.c.b16 %v646, %v642
    %v803 = vpack.c.b16 %v647, %v643
    %v804 = vpack.c.b16 %v648, %v644
    %v805 = vpack.c.b16 %v649, %v645
    %v806 = vpack.c.b16 %v654, %v650
    %v807 = vpack.c.b16 %v655, %v651
    %v808 = vpack.c.b16 %v656, %v652
    %v809 = vpack.c.b16 %v657, %v653
    %v810 = vpack.c.b16 %v662, %v658
    %v811 = vpack.c.b16 %v663, %v659
    %v812 = vpack.c.b16 %v664, %v660
    %v813 = vpack.c.b16 %v665, %v661
    %v814 = vpack.c.b16 %v670, %v666
    %v815 = vpack.c.b16 %v671, %v667
    %v816 = vpack.c.b16 %v672, %v668
    %v817 = vpack.c.b16 %v673, %v669
    %v818 = vpack.c.b16 %v678, %v674
    %v819 = vpack.c.b16 %v679, %v675
    %v820 = vpack.c.b16 %v680, %v676
    %v821 = vpack.c.b16 %v681, %v677
    %v822 = vpack.c.b16 %v686, %v682
    %v823 = vpack.c.b16 %v687, %v683
    %v824 = vpack.c.b16 %v688, %v684
    %v825 = vpack.c.b16 %v689, %v685
    %v826 = vpack.c.b16 %v694, %v690
    %v827 = vpack.c.b16 %v695, %v691
    %v828 = vpack.c.b16 %v696, %v692
    %v829 = vpack.c.b16 %v697, %v693
    %v830 = vpack.c.b16 %v702, %v698
    %v831 = vpack.c.b16 %v703, %v699
    %v832 = vpack.c.b16 %v704, %v700
    %v833 = vpack.c.b16 %v705, %v701
    %v834 = vpack.c.b16 %v710, %v706
    %v835 = vpack.c.b16 %v711, %v707
    %v836 = vpack.c.b16 %v712, %v708
    %v837 = vpack.c.b16 %v713, %v709
    %v838 = vpack.c.b16 %v718, %v714
    %v839 = vpack.c.b16 %v719, %v715
    %v840 = vpack.c.b16 %v720, %v716
    %v841 = vpack.c.b16 %v721, %v717
    %v842 = vpack.c.b16 %v726, %v722
    %v843 = vpack.c.b16 %v727, %v723
    %v844 = vpack.c.b16 %v728, %v724
    %v845 = vpack.c.b16 %v729, %v725
    %v846 = vpack.c.b16 %v734, %v730
    %v847 = vpack.c.b16 %v735, %v731
    %v848 = vpack.c.b16 %v736, %v732
    %v849 = vpack.c.b16 %v737, %v733
    %v850 = vpack.c.b16 %v742, %v738
    %v851 = vpack.c.b16 %v743, %v739
    %v852 = vpack.c.b16 %v744, %v740
    %v853 = vpack.c.b16 %v745, %v741
    %v854 = vpack.c.b16 %v750, %v746
    %v855 = vpack.c.b16 %v751, %v747
    %v856 = vpack.c.b16 %v752, %v748
    %v857 = vpack.c.b16 %v753, %v749
    %v858 = vpack.c.b16 %v758, %v754
    %v859 = vpack.c.b16 %v759, %v755
    %v860 = vpack.c.b16 %v760, %v756
    %v861 = vpack.c.b16 %v761, %v757
    %v862 = vpack.c.b16 %v766, %v762
    %v863 = vpack.c.b16 %v767, %v763
    %v864 = vpack.c.b16 %v768, %v764
    %v865 = vpack.c.b16 %v769, %v765
    %962 = vmatprep.subr.bf16.mxu0 %v771
    %963 = vmatpush1.bf16.msra.mxu0 %v770
    %964 = vmatprep.subr.bf16.mxu0 %v775
    %965 = vmatpush1.bf16.msra.mxu0 %v774
    %966 = vmatprep.subr.bf16.mxu0 %v779
    %967 = vmatpush1.bf16.msra.mxu0 %v778
    %968 = vmatprep.subr.bf16.mxu0 %v783
    %969 = vmatpush1.bf16.msra.mxu0 %v782
    %970 = vmatprep.subr.bf16.mxu0 %v787
    %971 = vmatpush1.bf16.msra.mxu0 %v786
    %972 = vmatprep.subr.bf16.mxu0 %v791
    %973 = vmatpush1.bf16.msra.mxu0 %v790
    %974 = vmatprep.subr.bf16.mxu0 %v795
    %975 = vmatpush1.bf16.msra.mxu0 %v794
    %976 = vmatprep.subr.bf16.mxu0 %v799
    %977 = vmatpush1.bf16.msra.mxu0 %v798
    %978 = vmatprep.subr.bf16.mxu0 %v803
    %979 = vmatpush1.bf16.msra.mxu0 %v802
    %980 = vmatprep.subr.bf16.mxu0 %v807
    %981 = vmatpush1.bf16.msra.mxu0 %v806
    %982 = vmatprep.subr.bf16.mxu0 %v811
    %983 = vmatpush1.bf16.msra.mxu0 %v810
    %984 = vmatprep.subr.bf16.mxu0 %v815
    %985 = vmatpush1.bf16.msra.mxu0 %v814
    %986 = vmatprep.subr.bf16.mxu0 %v819
    %987 = vmatpush1.bf16.msra.mxu0 %v818
    %988 = vmatprep.subr.bf16.mxu0 %v823
    %989 = vmatpush1.bf16.msra.mxu0 %v822
    %990 = vmatprep.subr.bf16.mxu0 %v827
    %991 = vmatpush1.bf16.msra.mxu0 %v826
    %992 = vmatprep.subr.bf16.mxu0 %v831
    %993 = vmatpush1.bf16.msra.mxu0 %v830
    %994 = vmatprep.mubr.bf16.mxu0 %v387
    %995 = vmatmul.mubr.bf16.gmra.mrb[0].mxu0 %v386
    %v996 = vpop.f32.mrb[0].mxu0
    %v997 = vadd.f32 %v209, %v996
    %v998 = vpop.f32.mrb[0].mxu0
    %v999 = vadd.f32 %v213, %v998
    %v1000 = vpop.f32.mrb[0].mxu0
    %v1001 = vadd.f32 %v209, %v1000
    %v1002 = vpop.f32.mrb[0].mxu0
    %v1003 = vadd.f32 %v213, %v1002
    %1004 = vmatprep.mubr.bf16.mxu0 %v390
    %1005 = vmatmul.mubr.bf16.gmra.mrb[0].mxu0 %v389
    %v1006 = vpop.f32.mrb[0].mxu0
    %v1007 = vadd.f32 %v209, %v1006
    %v1008 = vpop.f32.mrb[0].mxu0
    %v1009 = vadd.f32 %v213, %v1008
    %v1010 = vpop.f32.mrb[0].mxu0
    %v1011 = vadd.f32 %v209, %v1010
    %v1012 = vpop.f32.mrb[0].mxu0
    %v1013 = vadd.f32 %v213, %v1012
    %1014 = vmatprep.mubr.bf16.mxu0 %v393
    %1015 = vmatmul.mubr.bf16.gmra.mrb[0].mxu0 %v392
    %v1016 = vpop.f32.mrb[0].mxu0
    %v1017 = vadd.f32 %v209, %v1016
    %v1018 = vpop.f32.mrb[0].mxu0
    %v1019 = vadd.f32 %v213, %v1018
    %v1020 = vpop.f32.mrb[0].mxu0
    %v1021 = vadd.f32 %v209, %v1020
    %v1022 = vpop.f32.mrb[0].mxu0
    %v1023 = vadd.f32 %v213, %v1022
    %1024 = vmatprep.mubr.bf16.mxu0 %v396
    %1025 = vmatmul.mubr.bf16.gmra.mrb[0].mxu0 %v395
    %v1026 = vpop.f32.mrb[0].mxu0
    %v1027 = vadd.f32 %v209, %v1026
    %v1028 = vpop.f32.mrb[0].mxu0
    %v1029 = vadd.f32 %v213, %v1028
    %v1030 = vpop.f32.mrb[0].mxu0
    %v1031 = vadd.f32 %v209, %v1030
    %v1032 = vpop.f32.mrb[0].mxu0
    %v1033 = vadd.f32 %v213, %v1032
    %1034 = vmatprep.mubr.bf16.mxu0 %v399
    %1035 = vmatmul.mubr.bf16.gmra.mrb[0].mxu0 %v398
    %v1036 = vpop.f32.mrb[0].mxu0
    %v1037 = vadd.f32 %v209, %v1036
    %v1038 = vpop.f32.mrb[0].mxu0
    %v1039 = vadd.f32 %v213, %v1038
    %v1040 = vpop.f32.mrb[0].mxu0
    %v1041 = vadd.f32 %v209, %v1040
    %v1042 = vpop.f32.mrb[0].mxu0
    %v1043 = vadd.f32 %v213, %v1042
    %1044 = vmatprep.mubr.bf16.mxu0 %v402
    %1045 = vmatmul.mubr.bf16.gmra.mrb[0].mxu0 %v401
    %v1046 = vpop.f32.mrb[0].mxu0
    %v1047 = vadd.f32 %v209, %v1046
    %v1048 = vpop.f32.mrb[0].mxu0
    %v1049 = vadd.f32 %v213, %v1048
    %v1050 = vpop.f32.mrb[0].mxu0
    %v1051 = vadd.f32 %v209, %v1050
    %v1052 = vpop.f32.mrb[0].mxu0
    %v1053 = vadd.f32 %v213, %v1052
    %1054 = vmatprep.mubr.bf16.mxu0 %v405
    %1055 = vmatmul.mubr.bf16.gmra.mrb[0].mxu0 %v404
    %v1056 = vpop.f32.mrb[0].mxu0
    %v1057 = vadd.f32 %v209, %v1056
    %v1058 = vpop.f32.mrb[0].mxu0
    %v1059 = vadd.f32 %v213, %v1058
    %v1060 = vpop.f32.mrb[0].mxu0
    %v1061 = vadd.f32 %v209, %v1060
    %v1062 = vpop.f32.mrb[0].mxu0
    %v1063 = vadd.f32 %v213, %v1062
    %1064 = vmatprep.mubr.bf16.mxu0 %v408
    %1065 = vmatmul.mubr.bf16.gmra.mrb[0].mxu0 %v407
    %v1066 = vpop.f32.mrb[0].mxu0
    %v1067 = vadd.f32 %v209, %v1066
    %v1068 = vpop.f32.mrb[0].mxu0
    %v1069 = vadd.f32 %v213, %v1068
    %v1070 = vpop.f32.mrb[0].mxu0
    %v1071 = vadd.f32 %v209, %v1070
    %v1072 = vpop.f32.mrb[0].mxu0
    %v1073 = vadd.f32 %v213, %v1072
    %1074 = vmatprep.mubr.bf16.mxu0 %v411
    %1075 = vmatmul.mubr.bf16.gmra.mrb[0].mxu0 %v410
    %v1076 = vpop.f32.mrb[0].mxu0
    %v1077 = vadd.f32 %v209, %v1076
    %v1078 = vpop.f32.mrb[0].mxu0
    %v1079 = vadd.f32 %v213, %v1078
    %v1080 = vpop.f32.mrb[0].mxu0
    %v1081 = vadd.f32 %v209, %v1080
    %v1082 = vpop.f32.mrb[0].mxu0
    %v1083 = vadd.f32 %v213, %v1082
    %1084 = vmatprep.mubr.bf16.mxu0 %v414
    %1085 = vmatmul.mubr.bf16.gmra.mrb[0].mxu0 %v413
    %v1086 = vpop.f32.mrb[0].mxu0
    %v1087 = vadd.f32 %v209, %v1086
    %v1088 = vpop.f32.mrb[0].mxu0
    %v1089 = vadd.f32 %v213, %v1088
    %v1090 = vpop.f32.mrb[0].mxu0
    %v1091 = vadd.f32 %v209, %v1090
    %v1092 = vpop.f32.mrb[0].mxu0
    %v1093 = vadd.f32 %v213, %v1092
    %1094 = vmatprep.mubr.bf16.mxu0 %v417
    %1095 = vmatmul.mubr.bf16.gmra.mrb[0].mxu0 %v416
    %v1096 = vpop.f32.mrb[0].mxu0
    %v1097 = vadd.f32 %v209, %v1096
    %v1098 = vpop.f32.mrb[0].mxu0
    %v1099 = vadd.f32 %v213, %v1098
    %v1100 = vpop.f32.mrb[0].mxu0
    %v1101 = vadd.f32 %v209, %v1100
    %v1102 = vpop.f32.mrb[0].mxu0
    %v1103 = vadd.f32 %v213, %v1102
    %1104 = vmatprep.mubr.bf16.mxu0 %v420
    %1105 = vmatmul.mubr.bf16.gmra.mrb[0].mxu0 %v419
    %v1106 = vpop.f32.mrb[0].mxu0
    %v1107 = vadd.f32 %v209, %v1106
    %v1108 = vpop.f32.mrb[0].mxu0
    %v1109 = vadd.f32 %v213, %v1108
    %v1110 = vpop.f32.mrb[0].mxu0
    %v1111 = vadd.f32 %v209, %v1110
    %v1112 = vpop.f32.mrb[0].mxu0
    %v1113 = vadd.f32 %v213, %v1112
    %1114 = vmatprep.mubr.bf16.mxu0 %v423
    %1115 = vmatmul.mubr.bf16.gmra.mrb[0].mxu0 %v422
    %v1116 = vpop.f32.mrb[0].mxu0
    %v1117 = vadd.f32 %v209, %v1116
    %v1118 = vpop.f32.mrb[0].mxu0
    %v1119 = vadd.f32 %v213, %v1118
    %v1120 = vpop.f32.mrb[0].mxu0
    %v1121 = vadd.f32 %v209, %v1120
    %v1122 = vpop.f32.mrb[0].mxu0
    %v1123 = vadd.f32 %v213, %v1122
    %1124 = vmatprep.mubr.bf16.mxu0 %v426
    %1125 = vmatmul.mubr.bf16.gmra.mrb[0].mxu0 %v425
    %v1126 = vpop.f32.mrb[0].mxu0
    %v1127 = vadd.f32 %v209, %v1126
    %v1128 = vpop.f32.mrb[0].mxu0
    %v1129 = vadd.f32 %v213, %v1128
    %v1130 = vpop.f32.mrb[0].mxu0
    %v1131 = vadd.f32 %v209, %v1130
    %v1132 = vpop.f32.mrb[0].mxu0
    %v1133 = vadd.f32 %v213, %v1132
    %1134 = vmatprep.mubr.bf16.mxu0 %v429
    %1135 = vmatmul.mubr.bf16.gmra.mrb[0].mxu0 %v428
    %v1136 = vpop.f32.mrb[0].mxu0
    %v1137 = vadd.f32 %v209, %v1136
    %v1138 = vpop.f32.mrb[0].mxu0
    %v1139 = vadd.f32 %v213, %v1138
    %v1140 = vpop.f32.mrb[0].mxu0
    %v1141 = vadd.f32 %v209, %v1140
    %v1142 = vpop.f32.mrb[0].mxu0
    %v1143 = vadd.f32 %v213, %v1142
    %1144 = vmatprep.mubr.bf16.mxu0 %v432
    %1145 = vmatmul.mubr.bf16.gmra.mrb[0].mxu0 %v431
    %v1146 = vpop.f32.mrb[0].mxu0
    %v1147 = vadd.f32 %v209, %v1146
    %v1148 = vpop.f32.mrb[0].mxu0
    %v1149 = vadd.f32 %v213, %v1148
    %v1150 = vpop.f32.mrb[0].mxu0
    %v1151 = vadd.f32 %v209, %v1150
    %v1152 = vpop.f32.mrb[0].mxu0
    %v1153 = vadd.f32 %v213, %v1152
    %1154 = vdwg.mxu0
    %1155 = vmatprep.subr.bf16.mxu0 %v835
    %1156 = vmatpush1.bf16.msra.mxu0 %v834
    %1157 = vmatprep.subr.bf16.mxu0 %v839
    %1158 = vmatpush1.bf16.msra.mxu0 %v838
    %1159 = vmatprep.subr.bf16.mxu0 %v843
    %1160 = vmatpush1.bf16.msra.mxu0 %v842
    %1161 = vmatprep.subr.bf16.mxu0 %v847
    %1162 = vmatpush1.bf16.msra.mxu0 %v846
    %1163 = vmatprep.subr.bf16.mxu0 %v851
    %1164 = vmatpush1.bf16.msra.mxu0 %v850
    %1165 = vmatprep.subr.bf16.mxu0 %v855
    %1166 = vmatpush1.bf16.msra.mxu0 %v854
    %1167 = vmatprep.subr.bf16.mxu0 %v859
    %1168 = vmatpush1.bf16.msra.mxu0 %v858
    %1169 = vmatprep.subr.bf16.mxu0 %v863
    %1170 = vmatpush1.bf16.msra.mxu0 %v862
    %1171 = vmatprep.subr.bf16.mxu0 0
    %1172 = vmatpush1.bf16.msra.mxu0 0
    %1173 = vmatprep.subr.bf16.mxu0 0
    %1174 = vmatpush1.bf16.msra.mxu0 0
    %1175 = vmatprep.subr.bf16.mxu0 0
    %1176 = vmatpush1.bf16.msra.mxu0 0
    %1177 = vmatprep.subr.bf16.mxu0 0
    %1178 = vmatpush1.bf16.msra.mxu0 0
    %1179 = vmatprep.subr.bf16.mxu0 0
    %1180 = vmatpush1.bf16.msra.mxu0 0
    %1181 = vmatprep.subr.bf16.mxu0 0
    %1182 = vmatpush1.bf16.msra.mxu0 0
    %1183 = vmatprep.subr.bf16.mxu0 0
    %1184 = vmatpush1.bf16.msra.mxu0 0
    %1185 = vmatprep.subr.bf16.mxu0 0
    %1186 = vmatpush1.bf16.msra.mxu0 0
    %1187 = vmatprep.mubr.bf16.mxu0 0
    %1188 = vmatmul.mubr.bf16.gmra.mrb[0].mxu0 %v388
    %v1189 = vpop.f32.mrb[0].mxu0
    %v1190 = vadd.f32 %v997, %v1189
    %v1191 = vpop.f32.mrb[0].mxu0
    %v1192 = vadd.f32 %v999, %v1191
    %v1193 = vpop.f32.mrb[0].mxu0
    %v1194 = vadd.f32 %v1001, %v1193
    %v1195 = vpop.f32.mrb[0].mxu0
    %v1196 = vadd.f32 %v1003, %v1195
    %1197 = vmatprep.mubr.bf16.mxu0 0
    %1198 = vmatmul.mubr.bf16.gmra.mrb[0].mxu0 %v391
    %v1199 = vpop.f32.mrb[0].mxu0
    %v1200 = vadd.f32 %v1007, %v1199
    %v1201 = vpop.f32.mrb[0].mxu0
    %v1202 = vadd.f32 %v1009, %v1201
    %v1203 = vpop.f32.mrb[0].mxu0
    %v1204 = vadd.f32 %v1011, %v1203
    %v1205 = vpop.f32.mrb[0].mxu0
    %v1206 = vadd.f32 %v1013, %v1205
    %1207 = vmatprep.mubr.bf16.mxu0 0
    %1208 = vmatmul.mubr.bf16.gmra.mrb[0].mxu0 %v394
    %v1209 = vpop.f32.mrb[0].mxu0
    %v1210 = vadd.f32 %v1017, %v1209
    %v1211 = vpop.f32.mrb[0].mxu0
    %v1212 = vadd.f32 %v1019, %v1211
    %v1213 = vpop.f32.mrb[0].mxu0
    %v1214 = vadd.f32 %v1021, %v1213
    %v1215 = vpop.f32.mrb[0].mxu0
    %v1216 = vadd.f32 %v1023, %v1215
    %1217 = vmatprep.mubr.bf16.mxu0 0
    %1218 = vmatmul.mubr.bf16.gmra.mrb[0].mxu0 %v397
    %v1219 = vpop.f32.mrb[0].mxu0
    %v1220 = vadd.f32 %v1027, %v1219
    %v1221 = vpop.f32.mrb[0].mxu0
    %v1222 = vadd.f32 %v1029, %v1221
    %v1223 = vpop.f32.mrb[0].mxu0
    %v1224 = vadd.f32 %v1031, %v1223
    %v1225 = vpop.f32.mrb[0].mxu0
    %v1226 = vadd.f32 %v1033, %v1225
    %1227 = vmatprep.mubr.bf16.mxu0 0
    %1228 = vmatmul.mubr.bf16.gmra.mrb[0].mxu0 %v400
    %v1229 = vpop.f32.mrb[0].mxu0
    %v1230 = vadd.f32 %v1037, %v1229
    %v1231 = vpop.f32.mrb[0].mxu0
    %v1232 = vadd.f32 %v1039, %v1231
    %v1233 = vpop.f32.mrb[0].mxu0
    %v1234 = vadd.f32 %v1041, %v1233
    %v1235 = vpop.f32.mrb[0].mxu0
    %v1236 = vadd.f32 %v1043, %v1235
    %1237 = vmatprep.mubr.bf16.mxu0 0
    %1238 = vmatmul.mubr.bf16.gmra.mrb[0].mxu0 %v403
    %v1239 = vpop.f32.mrb[0].mxu0
    %v1240 = vadd.f32 %v1047, %v1239
    %v1241 = vpop.f32.mrb[0].mxu0
    %v1242 = vadd.f32 %v1049, %v1241
    %v1243 = vpop.f32.mrb[0].mxu0
    %v1244 = vadd.f32 %v1051, %v1243
    %v1245 = vpop.f32.mrb[0].mxu0
    %v1246 = vadd.f32 %v1053, %v1245
    %1247 = vmatprep.mubr.bf16.mxu0 0
    %1248 = vmatmul.mubr.bf16.gmra.mrb[0].mxu0 %v406
    %v1249 = vpop.f32.mrb[0].mxu0
    %v1250 = vadd.f32 %v1057, %v1249
    %v1251 = vpop.f32.mrb[0].mxu0
    %v1252 = vadd.f32 %v1059, %v1251
    %v1253 = vpop.f32.mrb[0].mxu0
    %v1254 = vadd.f32 %v1061, %v1253
    %v1255 = vpop.f32.mrb[0].mxu0
    %v1256 = vadd.f32 %v1063, %v1255
    %1257 = vmatprep.mubr.bf16.mxu0 0
    %1258 = vmatmul.mubr.bf16.gmra.mrb[0].mxu0 %v409
    %v1259 = vpop.f32.mrb[0].mxu0
    %v1260 = vadd.f32 %v1067, %v1259
    %v1261 = vpop.f32.mrb[0].mxu0
    %v1262 = vadd.f32 %v1069, %v1261
    %v1263 = vpop.f32.mrb[0].mxu0
    %v1264 = vadd.f32 %v1071, %v1263
    %v1265 = vpop.f32.mrb[0].mxu0
    %v1266 = vadd.f32 %v1073, %v1265
    %1267 = vmatprep.mubr.bf16.mxu0 0
    %1268 = vmatmul.mubr.bf16.gmra.mrb[0].mxu0 %v412
    %v1269 = vpop.f32.mrb[0].mxu0
    %v1270 = vadd.f32 %v1077, %v1269
    %v1271 = vpop.f32.mrb[0].mxu0
    %v1272 = vadd.f32 %v1079, %v1271
    %v1273 = vpop.f32.mrb[0].mxu0
    %v1274 = vadd.f32 %v1081, %v1273
    %v1275 = vpop.f32.mrb[0].mxu0
    %v1276 = vadd.f32 %v1083, %v1275
    %1277 = vmatprep.mubr.bf16.mxu0 0
    %1278 = vmatmul.mubr.bf16.gmra.mrb[0].mxu0 %v415
    %v1279 = vpop.f32.mrb[0].mxu0
    %v1280 = vadd.f32 %v1087, %v1279
    %v1281 = vpop.f32.mrb[0].mxu0
    %v1282 = vadd.f32 %v1089, %v1281
    %v1283 = vpop.f32.mrb[0].mxu0
    %v1284 = vadd.f32 %v1091, %v1283
    %v1285 = vpop.f32.mrb[0].mxu0
    %v1286 = vadd.f32 %v1093, %v1285
    %1287 = vmatprep.mubr.bf16.mxu0 0
    %1288 = vmatmul.mubr.bf16.gmra.mrb[0].mxu0 %v418
    %v1289 = vpop.f32.mrb[0].mxu0
    %v1290 = vadd.f32 %v1097, %v1289
    %v1291 = vpop.f32.mrb[0].mxu0
    %v1292 = vadd.f32 %v1099, %v1291
    %v1293 = vpop.f32.mrb[0].mxu0
    %v1294 = vadd.f32 %v1101, %v1293
    %v1295 = vpop.f32.mrb[0].mxu0
    %v1296 = vadd.f32 %v1103, %v1295
    %1297 = vmatprep.mubr.bf16.mxu0 0
    %1298 = vmatmul.mubr.bf16.gmra.mrb[0].mxu0 %v421
    %v1299 = vpop.f32.mrb[0].mxu0
    %v1300 = vadd.f32 %v1107, %v1299
    %v1301 = vpop.f32.mrb[0].mxu0
    %v1302 = vadd.f32 %v1109, %v1301
    %v1303 = vpop.f32.mrb[0].mxu0
    %v1304 = vadd.f32 %v1111, %v1303
    %v1305 = vpop.f32.mrb[0].mxu0
    %v1306 = vadd.f32 %v1113, %v1305
    %1307 = vmatprep.mubr.bf16.mxu0 0
    %1308 = vmatmul.mubr.bf16.gmra.mrb[0].mxu0 %v424
    %v1309 = vpop.f32.mrb[0].mxu0
    %v1310 = vadd.f32 %v1117, %v1309
    %v1311 = vpop.f32.mrb[0].mxu0
    %v1312 = vadd.f32 %v1119, %v1311
    %v1313 = vpop.f32.mrb[0].mxu0
    %v1314 = vadd.f32 %v1121, %v1313
    %v1315 = vpop.f32.mrb[0].mxu0
    %v1316 = vadd.f32 %v1123, %v1315
    %1317 = vmatprep.mubr.bf16.mxu0 0
    %1318 = vmatmul.mubr.bf16.gmra.mrb[0].mxu0 %v427
    %v1319 = vpop.f32.mrb[0].mxu0
    %v1320 = vadd.f32 %v1127, %v1319
    %v1321 = vpop.f32.mrb[0].mxu0
    %v1322 = vadd.f32 %v1129, %v1321
    %v1323 = vpop.f32.mrb[0].mxu0
    %v1324 = vadd.f32 %v1131, %v1323
    %v1325 = vpop.f32.mrb[0].mxu0
    %v1326 = vadd.f32 %v1133, %v1325
    %1327 = vmatprep.mubr.bf16.mxu0 0
    %1328 = vmatmul.mubr.bf16.gmra.mrb[0].mxu0 %v430
    %v1329 = vpop.f32.mrb[0].mxu0
    %v1330 = vadd.f32 %v1137, %v1329
    %v1331 = vpop.f32.mrb[0].mxu0
    %v1332 = vadd.f32 %v1139, %v1331
    %v1333 = vpop.f32.mrb[0].mxu0
    %v1334 = vadd.f32 %v1141, %v1333
    %v1335 = vpop.f32.mrb[0].mxu0
    %v1336 = vadd.f32 %v1143, %v1335
    %1337 = vmatprep.mubr.bf16.mxu0 0
    %1338 = vmatmul.mubr.bf16.gmra.mrb[0].mxu0 %v433
    %v1339 = vpop.f32.mrb[0].mxu0
    %v1340 = vadd.f32 %v1147, %v1339
    %v1341 = vpop.f32.mrb[0].mxu0
    %v1342 = vadd.f32 %v1149, %v1341
    %v1343 = vpop.f32.mrb[0].mxu0
    %v1344 = vadd.f32 %v1151, %v1343
    %v1345 = vpop.f32.mrb[0].mxu0
    %v1346 = vadd.f32 %v1153, %v1345
    %1347 = vdwg.mxu0
    %1348 = vmatprep.subr.bf16.mxu0 %v773
    %1349 = vmatpush1.bf16.msra.mxu0 %v772
    %1350 = vmatprep.subr.bf16.mxu0 %v777
    %1351 = vmatpush1.bf16.msra.mxu0 %v776
    %1352 = vmatprep.subr.bf16.mxu0 %v781
    %1353 = vmatpush1.bf16.msra.mxu0 %v780
    %1354 = vmatprep.subr.bf16.mxu0 %v785
    %1355 = vmatpush1.bf16.msra.mxu0 %v784
    %1356 = vmatprep.subr.bf16.mxu0 %v789
    %1357 = vmatpush1.bf16.msra.mxu0 %v788
    %1358 = vmatprep.subr.bf16.mxu0 %v793
    %1359 = vmatpush1.bf16.msra.mxu0 %v792
    %1360 = vmatprep.subr.bf16.mxu0 %v797
    %1361 = vmatpush1.bf16.msra.mxu0 %v796
    %1362 = vmatprep.subr.bf16.mxu0 %v801
    %1363 = vmatpush1.bf16.msra.mxu0 %v800
    %1364 = vmatprep.subr.bf16.mxu0 %v805
    %1365 = vmatpush1.bf16.msra.mxu0 %v804
    %1366 = vmatprep.subr.bf16.mxu0 %v809
    %1367 = vmatpush1.bf16.msra.mxu0 %v808
    %1368 = vmatprep.subr.bf16.mxu0 %v813
    %1369 = vmatpush1.bf16.msra.mxu0 %v812
    %1370 = vmatprep.subr.bf16.mxu0 %v817
    %1371 = vmatpush1.bf16.msra.mxu0 %v816
    %1372 = vmatprep.subr.bf16.mxu0 %v821
    %1373 = vmatpush1.bf16.msra.mxu0 %v820
    %1374 = vmatprep.subr.bf16.mxu0 %v825
    %1375 = vmatpush1.bf16.msra.mxu0 %v824
    %1376 = vmatprep.subr.bf16.mxu0 %v829
    %1377 = vmatpush1.bf16.msra.mxu0 %v828
    %1378 = vmatprep.subr.bf16.mxu0 %v833
    %1379 = vmatpush1.bf16.msra.mxu0 %v832
    %1380 = vmatprep.mubr.bf16.mxu0 %v387
    %1381 = vmatmul.mubr.bf16.gmra.mrb[0].mxu0 %v386
    %v1382 = vpop.f32.mrb[0].mxu0
    %v1383 = vadd.f32 %v217, %v1382
    %v1384 = vpop.f32.mrb[0].mxu0
    %v1385 = vadd.f32 %v221, %v1384
    %v1386 = vpop.f32.mrb[0].mxu0
    %v1387 = vadd.f32 %v217, %v1386
    %v1388 = vpop.f32.mrb[0].mxu0
    %v1389 = vadd.f32 %v221, %v1388
    %1390 = vmatprep.mubr.bf16.mxu0 %v390
    %1391 = vmatmul.mubr.bf16.gmra.mrb[0].mxu0 %v389
    %v1392 = vpop.f32.mrb[0].mxu0
    %v1393 = vadd.f32 %v217, %v1392
    %v1394 = vpop.f32.mrb[0].mxu0
    %v1395 = vadd.f32 %v221, %v1394
    %v1396 = vpop.f32.mrb[0].mxu0
    %v1397 = vadd.f32 %v217, %v1396
    %v1398 = vpop.f32.mrb[0].mxu0
    %v1399 = vadd.f32 %v221, %v1398
    %1400 = vmatprep.mubr.bf16.mxu0 %v393
    %1401 = vmatmul.mubr.bf16.gmra.mrb[0].mxu0 %v392
    %v1402 = vpop.f32.mrb[0].mxu0
    %v1403 = vadd.f32 %v217, %v1402
    %v1404 = vpop.f32.mrb[0].mxu0
    %v1405 = vadd.f32 %v221, %v1404
    %v1406 = vpop.f32.mrb[0].mxu0
    %v1407 = vadd.f32 %v217, %v1406
    %v1408 = vpop.f32.mrb[0].mxu0
    %v1409 = vadd.f32 %v221, %v1408
    %1410 = vmatprep.mubr.bf16.mxu0 %v396
    %1411 = vmatmul.mubr.bf16.gmra.mrb[0].mxu0 %v395
    %v1412 = vpop.f32.mrb[0].mxu0
    %v1413 = vadd.f32 %v217, %v1412
    %v1414 = vpop.f32.mrb[0].mxu0
    %v1415 = vadd.f32 %v221, %v1414
    %v1416 = vpop.f32.mrb[0].mxu0
    %v1417 = vadd.f32 %v217, %v1416
    %v1418 = vpop.f32.mrb[0].mxu0
    %v1419 = vadd.f32 %v221, %v1418
    %1420 = vmatprep.mubr.bf16.mxu0 %v399
    %1421 = vmatmul.mubr.bf16.gmra.mrb[0].mxu0 %v398
    %v1422 = vpop.f32.mrb[0].mxu0
    %v1423 = vadd.f32 %v217, %v1422
    %v1424 = vpop.f32.mrb[0].mxu0
    %v1425 = vadd.f32 %v221, %v1424
    %v1426 = vpop.f32.mrb[0].mxu0
    %v1427 = vadd.f32 %v217, %v1426
    %v1428 = vpop.f32.mrb[0].mxu0
    %v1429 = vadd.f32 %v221, %v1428
    %1430 = vmatprep.mubr.bf16.mxu0 %v402
    %1431 = vmatmul.mubr.bf16.gmra.mrb[0].mxu0 %v401
    %v1432 = vpop.f32.mrb[0].mxu0
    %v1433 = vadd.f32 %v217, %v1432
    %v1434 = vpop.f32.mrb[0].mxu0
    %v1435 = vadd.f32 %v221, %v1434
    %v1436 = vpop.f32.mrb[0].mxu0
    %v1437 = vadd.f32 %v217, %v1436
    %v1438 = vpop.f32.mrb[0].mxu0
    %v1439 = vadd.f32 %v221, %v1438
    %1440 = vmatprep.mubr.bf16.mxu0 %v405
    %1441 = vmatmul.mubr.bf16.gmra.mrb[0].mxu0 %v404
    %v1442 = vpop.f32.mrb[0].mxu0
    %v1443 = vadd.f32 %v217, %v1442
    %v1444 = vpop.f32.mrb[0].mxu0
    %v1445 = vadd.f32 %v221, %v1444
    %v1446 = vpop.f32.mrb[0].mxu0
    %v1447 = vadd.f32 %v217, %v1446
    %v1448 = vpop.f32.mrb[0].mxu0
    %v1449 = vadd.f32 %v221, %v1448
    %1450 = vmatprep.mubr.bf16.mxu0 %v408
    %1451 = vmatmul.mubr.bf16.gmra.mrb[0].mxu0 %v407
    %v1452 = vpop.f32.mrb[0].mxu0
    %v1453 = vadd.f32 %v217, %v1452
    %v1454 = vpop.f32.mrb[0].mxu0
    %v1455 = vadd.f32 %v221, %v1454
    %v1456 = vpop.f32.mrb[0].mxu0
    %v1457 = vadd.f32 %v217, %v1456
    %v1458 = vpop.f32.mrb[0].mxu0
    %v1459 = vadd.f32 %v221, %v1458
    %1460 = vmatprep.mubr.bf16.mxu0 %v411
    %1461 = vmatmul.mubr.bf16.gmra.mrb[0].mxu0 %v410
    %v1462 = vpop.f32.mrb[0].mxu0
    %v1463 = vadd.f32 %v217, %v1462
    %v1464 = vpop.f32.mrb[0].mxu0
    %v1465 = vadd.f32 %v221, %v1464
    %v1466 = vpop.f32.mrb[0].mxu0
    %v1467 = vadd.f32 %v217, %v1466
    %v1468 = vpop.f32.mrb[0].mxu0
    %v1469 = vadd.f32 %v221, %v1468
    %1470 = vmatprep.mubr.bf16.mxu0 %v414
    %1471 = vmatmul.mubr.bf16.gmra.mrb[0].mxu0 %v413
    %v1472 = vpop.f32.mrb[0].mxu0
    %v1473 = vadd.f32 %v217, %v1472
    %v1474 = vpop.f32.mrb[0].mxu0
    %v1475 = vadd.f32 %v221, %v1474
    %v1476 = vpop.f32.mrb[0].mxu0
    %v1477 = vadd.f32 %v217, %v1476
    %v1478 = vpop.f32.mrb[0].mxu0
    %v1479 = vadd.f32 %v221, %v1478
    %1480 = vmatprep.mubr.bf16.mxu0 %v417
    %1481 = vmatmul.mubr.bf16.gmra.mrb[0].mxu0 %v416
    %v1482 = vpop.f32.mrb[0].mxu0
    %v1483 = vadd.f32 %v217, %v1482
    %v1484 = vpop.f32.mrb[0].mxu0
    %v1485 = vadd.f32 %v221, %v1484
    %v1486 = vpop.f32.mrb[0].mxu0
    %v1487 = vadd.f32 %v217, %v1486
    %v1488 = vpop.f32.mrb[0].mxu0
    %v1489 = vadd.f32 %v221, %v1488
    %1490 = vmatprep.mubr.bf16.mxu0 %v420
    %1491 = vmatmul.mubr.bf16.gmra.mrb[0].mxu0 %v419
    %v1492 = vpop.f32.mrb[0].mxu0
    %v1493 = vadd.f32 %v217, %v1492
    %v1494 = vpop.f32.mrb[0].mxu0
    %v1495 = vadd.f32 %v221, %v1494
    %v1496 = vpop.f32.mrb[0].mxu0
    %v1497 = vadd.f32 %v217, %v1496
    %v1498 = vpop.f32.mrb[0].mxu0
    %v1499 = vadd.f32 %v221, %v1498
    %1500 = vmatprep.mubr.bf16.mxu0 %v423
    %1501 = vmatmul.mubr.bf16.gmra.mrb[0].mxu0 %v422
    %v1502 = vpop.f32.mrb[0].mxu0
    %v1503 = vadd.f32 %v217, %v1502
    %v1504 = vpop.f32.mrb[0].mxu0
    %v1505 = vadd.f32 %v221, %v1504
    %v1506 = vpop.f32.mrb[0].mxu0
    %v1507 = vadd.f32 %v217, %v1506
    %v1508 = vpop.f32.mrb[0].mxu0
    %v1509 = vadd.f32 %v221, %v1508
    %1510 = vmatprep.mubr.bf16.mxu0 %v426
    %1511 = vmatmul.mubr.bf16.gmra.mrb[0].mxu0 %v425
    %v1512 = vpop.f32.mrb[0].mxu0
    %v1513 = vadd.f32 %v217, %v1512
    %v1514 = vpop.f32.mrb[0].mxu0
    %v1515 = vadd.f32 %v221, %v1514
    %v1516 = vpop.f32.mrb[0].mxu0
    %v1517 = vadd.f32 %v217, %v1516
    %v1518 = vpop.f32.mrb[0].mxu0
    %v1519 = vadd.f32 %v221, %v1518
    %1520 = vmatprep.mubr.bf16.mxu0 %v429
    %1521 = vmatmul.mubr.bf16.gmra.mrb[0].mxu0 %v428
    %v1522 = vpop.f32.mrb[0].mxu0
    %v1523 = vadd.f32 %v217, %v1522
    %v1524 = vpop.f32.mrb[0].mxu0
    %v1525 = vadd.f32 %v221, %v1524
    %v1526 = vpop.f32.mrb[0].mxu0
    %v1527 = vadd.f32 %v217, %v1526
    %v1528 = vpop.f32.mrb[0].mxu0
    %v1529 = vadd.f32 %v221, %v1528
    %1530 = vmatprep.mubr.bf16.mxu0 %v432
    %1531 = vmatmul.mubr.bf16.gmra.mrb[0].mxu0 %v431
    %v1532 = vpop.f32.mrb[0].mxu0
    %v1533 = vadd.f32 %v217, %v1532
    %v1534 = vpop.f32.mrb[0].mxu0
    %v1535 = vadd.f32 %v221, %v1534
    %v1536 = vpop.f32.mrb[0].mxu0
    %v1537 = vadd.f32 %v217, %v1536
    %v1538 = vpop.f32.mrb[0].mxu0
    %v1539 = vadd.f32 %v221, %v1538
    %1540 = vdwg.mxu0
    %1541 = vmatprep.subr.bf16.mxu0 %v837
    %1542 = vmatpush1.bf16.msra.mxu0 %v836
    %1543 = vmatprep.subr.bf16.mxu0 %v841
    %1544 = vmatpush1.bf16.msra.mxu0 %v840
    %1545 = vmatprep.subr.bf16.mxu0 %v845
    %1546 = vmatpush1.bf16.msra.mxu0 %v844
    %1547 = vmatprep.subr.bf16.mxu0 %v849
    %1548 = vmatpush1.bf16.msra.mxu0 %v848
    %1549 = vmatprep.subr.bf16.mxu0 %v853
    %1550 = vmatpush1.bf16.msra.mxu0 %v852
    %1551 = vmatprep.subr.bf16.mxu0 %v857
    %1552 = vmatpush1.bf16.msra.mxu0 %v856
    %1553 = vmatprep.subr.bf16.mxu0 %v861
    %1554 = vmatpush1.bf16.msra.mxu0 %v860
    %1555 = vmatprep.subr.bf16.mxu0 %v865
    %1556 = vmatpush1.bf16.msra.mxu0 %v864
    %1557 = vmatprep.subr.bf16.mxu0 0
    %1558 = vmatpush1.bf16.msra.mxu0 0
    %1559 = vmatprep.subr.bf16.mxu0 0
    %1560 = vmatpush1.bf16.msra.mxu0 0
    %1561 = vmatprep.subr.bf16.mxu0 0
    %1562 = vmatpush1.bf16.msra.mxu0 0
    %1563 = vmatprep.subr.bf16.mxu0 0
    %1564 = vmatpush1.bf16.msra.mxu0 0
    %1565 = vmatprep.subr.bf16.mxu0 0
    %1566 = vmatpush1.bf16.msra.mxu0 0
    %1567 = vmatprep.subr.bf16.mxu0 0
    %1568 = vmatpush1.bf16.msra.mxu0 0
    %1569 = vmatprep.subr.bf16.mxu0 0
    %1570 = vmatpush1.bf16.msra.mxu0 0
    %1571 = vmatprep.subr.bf16.mxu0 0
    %1572 = vmatpush1.bf16.msra.mxu0 0
    %1573 = vmatprep.mubr.bf16.mxu0 0
    %1574 = vmatmul.mubr.bf16.gmra.mrb[0].mxu0 %v388
    %v1575 = vpop.f32.mrb[0].mxu0
    %v1576 = vadd.f32 %v1383, %v1575
    %v1577 = vpop.f32.mrb[0].mxu0
    %v1578 = vadd.f32 %v1385, %v1577
    %v1579 = vpop.f32.mrb[0].mxu0
    %v1580 = vadd.f32 %v1387, %v1579
    %v1581 = vpop.f32.mrb[0].mxu0
    %v1582 = vadd.f32 %v1389, %v1581
    %1583 = vmatprep.mubr.bf16.mxu0 0
    %1584 = vmatmul.mubr.bf16.gmra.mrb[0].mxu0 %v391
    %v1585 = vpop.f32.mrb[0].mxu0
    %v1586 = vadd.f32 %v1393, %v1585
    %v1587 = vpop.f32.mrb[0].mxu0
    %v1588 = vadd.f32 %v1395, %v1587
    %v1589 = vpop.f32.mrb[0].mxu0
    %v1590 = vadd.f32 %v1397, %v1589
    %v1591 = vpop.f32.mrb[0].mxu0
    %v1592 = vadd.f32 %v1399, %v1591
    %1593 = vmatprep.mubr.bf16.mxu0 0
    %1594 = vmatmul.mubr.bf16.gmra.mrb[0].mxu0 %v394
    %v1595 = vpop.f32.mrb[0].mxu0
    %v1596 = vadd.f32 %v1403, %v1595
    %v1597 = vpop.f32.mrb[0].mxu0
    %v1598 = vadd.f32 %v1405, %v1597
    %v1599 = vpop.f32.mrb[0].mxu0
    %v1600 = vadd.f32 %v1407, %v1599
    %v1601 = vpop.f32.mrb[0].mxu0
    %v1602 = vadd.f32 %v1409, %v1601
    %1603 = vmatprep.mubr.bf16.mxu0 0
    %1604 = vmatmul.mubr.bf16.gmra.mrb[0].mxu0 %v397
    %v1605 = vpop.f32.mrb[0].mxu0
    %v1606 = vadd.f32 %v1413, %v1605
    %v1607 = vpop.f32.mrb[0].mxu0
    %v1608 = vadd.f32 %v1415, %v1607
    %v1609 = vpop.f32.mrb[0].mxu0
    %v1610 = vadd.f32 %v1417, %v1609
    %v1611 = vpop.f32.mrb[0].mxu0
    %v1612 = vadd.f32 %v1419, %v1611
    %1613 = vmatprep.mubr.bf16.mxu0 0
    %1614 = vmatmul.mubr.bf16.gmra.mrb[0].mxu0 %v400
    %v1615 = vpop.f32.mrb[0].mxu0
    %v1616 = vadd.f32 %v1423, %v1615
    %v1617 = vpop.f32.mrb[0].mxu0
    %v1618 = vadd.f32 %v1425, %v1617
    %v1619 = vpop.f32.mrb[0].mxu0
    %v1620 = vadd.f32 %v1427, %v1619
    %v1621 = vpop.f32.mrb[0].mxu0
    %v1622 = vadd.f32 %v1429, %v1621
    %1623 = vmatprep.mubr.bf16.mxu0 0
    %1624 = vmatmul.mubr.bf16.gmra.mrb[0].mxu0 %v403
    %v1625 = vpop.f32.mrb[0].mxu0
    %v1626 = vadd.f32 %v1433, %v1625
    %v1627 = vpop.f32.mrb[0].mxu0
    %v1628 = vadd.f32 %v1435, %v1627
    %v1629 = vpop.f32.mrb[0].mxu0
    %v1630 = vadd.f32 %v1437, %v1629
    %v1631 = vpop.f32.mrb[0].mxu0
    %v1632 = vadd.f32 %v1439, %v1631
    %1633 = vmatprep.mubr.bf16.mxu0 0
    %1634 = vmatmul.mubr.bf16.gmra.mrb[0].mxu0 %v406
    %v1635 = vpop.f32.mrb[0].mxu0
    %v1636 = vadd.f32 %v1443, %v1635
    %v1637 = vpop.f32.mrb[0].mxu0
    %v1638 = vadd.f32 %v1445, %v1637
    %v1639 = vpop.f32.mrb[0].mxu0
    %v1640 = vadd.f32 %v1447, %v1639
    %v1641 = vpop.f32.mrb[0].mxu0
    %v1642 = vadd.f32 %v1449, %v1641
    %1643 = vmatprep.mubr.bf16.mxu0 0
    %1644 = vmatmul.mubr.bf16.gmra.mrb[0].mxu0 %v409
    %v1645 = vpop.f32.mrb[0].mxu0
    %v1646 = vadd.f32 %v1453, %v1645
    %v1647 = vpop.f32.mrb[0].mxu0
    %v1648 = vadd.f32 %v1455, %v1647
    %v1649 = vpop.f32.mrb[0].mxu0
    %v1650 = vadd.f32 %v1457, %v1649
    %v1651 = vpop.f32.mrb[0].mxu0
    %v1652 = vadd.f32 %v1459, %v1651
    %1653 = vmatprep.mubr.bf16.mxu0 0
    %1654 = vmatmul.mubr.bf16.gmra.mrb[0].mxu0 %v412
    %v1655 = vpop.f32.mrb[0].mxu0
    %v1656 = vadd.f32 %v1463, %v1655
    %v1657 = vpop.f32.mrb[0].mxu0
    %v1658 = vadd.f32 %v1465, %v1657
    %v1659 = vpop.f32.mrb[0].mxu0
    %v1660 = vadd.f32 %v1467, %v1659
    %v1661 = vpop.f32.mrb[0].mxu0
    %v1662 = vadd.f32 %v1469, %v1661
    %1663 = vmatprep.mubr.bf16.mxu0 0
    %1664 = vmatmul.mubr.bf16.gmra.mrb[0].mxu0 %v415
    %v1665 = vpop.f32.mrb[0].mxu0
    %v1666 = vadd.f32 %v1473, %v1665
    %v1667 = vpop.f32.mrb[0].mxu0
    %v1668 = vadd.f32 %v1475, %v1667
    %v1669 = vpop.f32.mrb[0].mxu0
    %v1670 = vadd.f32 %v1477, %v1669
    %v1671 = vpop.f32.mrb[0].mxu0
    %v1672 = vadd.f32 %v1479, %v1671
    %1673 = vmatprep.mubr.bf16.mxu0 0
    %1674 = vmatmul.mubr.bf16.gmra.mrb[0].mxu0 %v418
    %v1675 = vpop.f32.mrb[0].mxu0
    %v1676 = vadd.f32 %v1483, %v1675
    %v1677 = vpop.f32.mrb[0].mxu0
    %v1678 = vadd.f32 %v1485, %v1677
    %v1679 = vpop.f32.mrb[0].mxu0
    %v1680 = vadd.f32 %v1487, %v1679
    %v1681 = vpop.f32.mrb[0].mxu0
    %v1682 = vadd.f32 %v1489, %v1681
    %1683 = vmatprep.mubr.bf16.mxu0 0
    %1684 = vmatmul.mubr.bf16.gmra.mrb[0].mxu0 %v421
    %v1685 = vpop.f32.mrb[0].mxu0
    %v1686 = vadd.f32 %v1493, %v1685
    %v1687 = vpop.f32.mrb[0].mxu0
    %v1688 = vadd.f32 %v1495, %v1687
    %v1689 = vpop.f32.mrb[0].mxu0
    %v1690 = vadd.f32 %v1497, %v1689
    %v1691 = vpop.f32.mrb[0].mxu0
    %v1692 = vadd.f32 %v1499, %v1691
    %1693 = vmatprep.mubr.bf16.mxu0 0
    %1694 = vmatmul.mubr.bf16.gmra.mrb[0].mxu0 %v424
    %v1695 = vpop.f32.mrb[0].mxu0
    %v1696 = vadd.f32 %v1503, %v1695
    %v1697 = vpop.f32.mrb[0].mxu0
    %v1698 = vadd.f32 %v1505, %v1697
    %v1699 = vpop.f32.mrb[0].mxu0
    %v1700 = vadd.f32 %v1507, %v1699
    %v1701 = vpop.f32.mrb[0].mxu0
    %v1702 = vadd.f32 %v1509, %v1701
    %1703 = vmatprep.mubr.bf16.mxu0 0
    %1704 = vmatmul.mubr.bf16.gmra.mrb[0].mxu0 %v427
    %v1705 = vpop.f32.mrb[0].mxu0
    %v1706 = vadd.f32 %v1513, %v1705
    %v1707 = vpop.f32.mrb[0].mxu0
    %v1708 = vadd.f32 %v1515, %v1707
    %v1709 = vpop.f32.mrb[0].mxu0
    %v1710 = vadd.f32 %v1517, %v1709
    %v1711 = vpop.f32.mrb[0].mxu0
    %v1712 = vadd.f32 %v1519, %v1711
    %1713 = vmatprep.mubr.bf16.mxu0 0
    %1714 = vmatmul.mubr.bf16.gmra.mrb[0].mxu0 %v430
    %v1715 = vpop.f32.mrb[0].mxu0
    %v1716 = vadd.f32 %v1523, %v1715
    %v1717 = vpop.f32.mrb[0].mxu0
    %v1718 = vadd.f32 %v1525, %v1717
    %v1719 = vpop.f32.mrb[0].mxu0
    %v1720 = vadd.f32 %v1527, %v1719
    %v1721 = vpop.f32.mrb[0].mxu0
    %v1722 = vadd.f32 %v1529, %v1721
    %1723 = vmatprep.mubr.bf16.mxu0 0
    %1724 = vmatmul.mubr.bf16.gmra.mrb[0].mxu0 %v433
    %v1725 = vpop.f32.mrb[0].mxu0
    %v1726 = vadd.f32 %v1533, %v1725
    %v1727 = vpop.f32.mrb[0].mxu0
    %v1728 = vadd.f32 %v1535, %v1727
    %v1729 = vpop.f32.mrb[0].mxu0
    %v1730 = vadd.f32 %v1537, %v1729
    %v1731 = vpop.f32.mrb[0].mxu0
    %v1732 = vadd.f32 %v1539, %v1731
    %1733 = vdwg.mxu0
    %v1734 = vpack.c.bf16 %v1194, %v1190
    %v1735 = vpack.c.bf16 %v1196, %v1192
    %v1736 = vpack.c.bf16 %v1580, %v1576
    %v1737 = vpack.c.bf16 %v1582, %v1578
    %v1738 = vpack.c.bf16 %v1204, %v1200
    %v1739 = vpack.c.bf16 %v1206, %v1202
    %v1740 = vpack.c.bf16 %v1590, %v1586
    %v1741 = vpack.c.bf16 %v1592, %v1588
    %v1742 = vpack.c.bf16 %v1214, %v1210
    %v1743 = vpack.c.bf16 %v1216, %v1212
    %v1744 = vpack.c.bf16 %v1600, %v1596
    %v1745 = vpack.c.bf16 %v1602, %v1598
    %v1746 = vpack.c.bf16 %v1224, %v1220
    %v1747 = vpack.c.bf16 %v1226, %v1222
    %v1748 = vpack.c.bf16 %v1610, %v1606
    %v1749 = vpack.c.bf16 %v1612, %v1608
    %v1750 = vpack.c.bf16 %v1234, %v1230
    %v1751 = vpack.c.bf16 %v1236, %v1232
    %v1752 = vpack.c.bf16 %v1620, %v1616
    %v1753 = vpack.c.bf16 %v1622, %v1618
    %v1754 = vpack.c.bf16 %v1244, %v1240
    %v1755 = vpack.c.bf16 %v1246, %v1242
    %v1756 = vpack.c.bf16 %v1630, %v1626
    %v1757 = vpack.c.bf16 %v1632, %v1628
    %v1758 = vpack.c.bf16 %v1254, %v1250
    %v1759 = vpack.c.bf16 %v1256, %v1252
    %v1760 = vpack.c.bf16 %v1640, %v1636
    %v1761 = vpack.c.bf16 %v1642, %v1638
    %v1762 = vpack.c.bf16 %v1264, %v1260
    %v1763 = vpack.c.bf16 %v1266, %v1262
    %v1764 = vpack.c.bf16 %v1650, %v1646
    %v1765 = vpack.c.bf16 %v1652, %v1648
    %v1766 = vpack.c.bf16 %v1274, %v1270
    %v1767 = vpack.c.bf16 %v1276, %v1272
    %v1768 = vpack.c.bf16 %v1660, %v1656
    %v1769 = vpack.c.bf16 %v1662, %v1658
    %v1770 = vpack.c.bf16 %v1284, %v1280
    %v1771 = vpack.c.bf16 %v1286, %v1282
    %v1772 = vpack.c.bf16 %v1670, %v1666
    %v1773 = vpack.c.bf16 %v1672, %v1668
    %v1774 = vpack.c.bf16 %v1294, %v1290
    %v1775 = vpack.c.bf16 %v1296, %v1292
    %v1776 = vpack.c.bf16 %v1680, %v1676
    %v1777 = vpack.c.bf16 %v1682, %v1678
    %v1778 = vpack.c.bf16 %v1304, %v1300
    %v1779 = vpack.c.bf16 %v1306, %v1302
    %v1780 = vpack.c.bf16 %v1690, %v1686
    %v1781 = vpack.c.bf16 %v1692, %v1688
    %v1782 = vpack.c.bf16 %v1314, %v1310
    %v1783 = vpack.c.bf16 %v1316, %v1312
    %v1784 = vpack.c.bf16 %v1700, %v1696
    %v1785 = vpack.c.bf16 %v1702, %v1698
    %v1786 = vpack.c.bf16 %v1324, %v1320
    %v1787 = vpack.c.bf16 %v1326, %v1322
    %v1788 = vpack.c.bf16 %v1710, %v1706
    %v1789 = vpack.c.bf16 %v1712, %v1708
    %v1790 = vpack.c.bf16 %v1334, %v1330
    %v1791 = vpack.c.bf16 %v1336, %v1332
    %v1792 = vpack.c.bf16 %v1720, %v1716
    %v1793 = vpack.c.bf16 %v1722, %v1718
    %v1794 = vpack.c.bf16 %v1344, %v1340
    %v1795 = vpack.c.bf16 %v1346, %v1342
    %v1796 = vpack.c.bf16 %v1730, %v1726
    %v1797 = vpack.c.bf16 %v1732, %v1728
    %v1862 = vunpack.c.l.b16 %v1734
    %v1863 = vunpack.c.l.b16 %v1735
    %v1864 = vunpack.c.l.b16 %v1736
    %v1865 = vunpack.c.l.b16 %v1737
    %v1866 = vunpack.c.h.b16 %v1734
    %v1867 = vunpack.c.h.b16 %v1735
    %v1868 = vunpack.c.h.b16 %v1736
    %v1869 = vunpack.c.h.b16 %v1737
    %v1870 = vunpack.c.l.b16 %v1738
    %v1871 = vunpack.c.l.b16 %v1739
    %v1872 = vunpack.c.l.b16 %v1740
    %v1873 = vunpack.c.l.b16 %v1741
    %v1874 = vunpack.c.h.b16 %v1738
    %v1875 = vunpack.c.h.b16 %v1739
    %v1876 = vunpack.c.h.b16 %v1740
    %v1877 = vunpack.c.h.b16 %v1741
    %v1878 = vunpack.c.l.b16 %v1742
    %v1879 = vunpack.c.l.b16 %v1743
    %v1880 = vunpack.c.l.b16 %v1744
    %v1881 = vunpack.c.l.b16 %v1745
    %v1882 = vunpack.c.h.b16 %v1742
    %v1883 = vunpack.c.h.b16 %v1743
    %v1884 = vunpack.c.h.b16 %v1744
    %v1885 = vunpack.c.h.b16 %v1745
    %v1886 = vunpack.c.l.b16 %v1746
    %v1887 = vunpack.c.l.b16 %v1747
    %v1888 = vunpack.c.l.b16 %v1748
    %v1889 = vunpack.c.l.b16 %v1749
    %v1890 = vunpack.c.h.b16 %v1746
    %v1891 = vunpack.c.h.b16 %v1747
    %v1892 = vunpack.c.h.b16 %v1748
    %v1893 = vunpack.c.h.b16 %v1749
    %v1894 = vunpack.c.l.b16 %v1750
    %v1895 = vunpack.c.l.b16 %v1751
    %v1896 = vunpack.c.l.b16 %v1752
    %v1897 = vunpack.c.l.b16 %v1753
    %v1898 = vunpack.c.h.b16 %v1750
    %v1899 = vunpack.c.h.b16 %v1751
    %v1900 = vunpack.c.h.b16 %v1752
    %v1901 = vunpack.c.h.b16 %v1753
    %v1902 = vunpack.c.l.b16 %v1754
    %v1903 = vunpack.c.l.b16 %v1755
    %v1904 = vunpack.c.l.b16 %v1756
    %v1905 = vunpack.c.l.b16 %v1757
    %v1906 = vunpack.c.h.b16 %v1754
    %v1907 = vunpack.c.h.b16 %v1755
    %v1908 = vunpack.c.h.b16 %v1756
    %v1909 = vunpack.c.h.b16 %v1757
    %v1910 = vunpack.c.l.b16 %v1758
    %v1911 = vunpack.c.l.b16 %v1759
    %v1912 = vunpack.c.l.b16 %v1760
    %v1913 = vunpack.c.l.b16 %v1761
    %v1914 = vunpack.c.h.b16 %v1758
    %v1915 = vunpack.c.h.b16 %v1759
    %v1916 = vunpack.c.h.b16 %v1760
    %v1917 = vunpack.c.h.b16 %v1761
    %v1918 = vunpack.c.l.b16 %v1762
    %v1919 = vunpack.c.l.b16 %v1763
    %v1920 = vunpack.c.l.b16 %v1764
    %v1921 = vunpack.c.l.b16 %v1765
    %v1922 = vunpack.c.h.b16 %v1762
    %v1923 = vunpack.c.h.b16 %v1763
    %v1924 = vunpack.c.h.b16 %v1764
    %v1925 = vunpack.c.h.b16 %v1765
    %v1926 = vunpack.c.l.b16 %v1766
    %v1927 = vunpack.c.l.b16 %v1767
    %v1928 = vunpack.c.l.b16 %v1768
    %v1929 = vunpack.c.l.b16 %v1769
    %v1930 = vunpack.c.h.b16 %v1766
    %v1931 = vunpack.c.h.b16 %v1767
    %v1932 = vunpack.c.h.b16 %v1768
    %v1933 = vunpack.c.h.b16 %v1769
    %v1934 = vunpack.c.l.b16 %v1770
    %v1935 = vunpack.c.l.b16 %v1771
    %v1936 = vunpack.c.l.b16 %v1772
    %v1937 = vunpack.c.l.b16 %v1773
    %v1938 = vunpack.c.h.b16 %v1770
    %v1939 = vunpack.c.h.b16 %v1771
    %v1940 = vunpack.c.h.b16 %v1772
    %v1941 = vunpack.c.h.b16 %v1773
    %v1942 = vunpack.c.l.b16 %v1774
    %v1943 = vunpack.c.l.b16 %v1775
    %v1944 = vunpack.c.l.b16 %v1776
    %v1945 = vunpack.c.l.b16 %v1777
    %v1946 = vunpack.c.h.b16 %v1774
    %v1947 = vunpack.c.h.b16 %v1775
    %v1948 = vunpack.c.h.b16 %v1776
    %v1949 = vunpack.c.h.b16 %v1777
    %v1950 = vunpack.c.l.b16 %v1778
    %v1951 = vunpack.c.l.b16 %v1779
    %v1952 = vunpack.c.l.b16 %v1780
    %v1953 = vunpack.c.l.b16 %v1781
    %v1954 = vunpack.c.h.b16 %v1778
    %v1955 = vunpack.c.h.b16 %v1779
    %v1956 = vunpack.c.h.b16 %v1780
    %v1957 = vunpack.c.h.b16 %v1781
    %v1958 = vunpack.c.l.b16 %v1782
    %v1959 = vunpack.c.l.b16 %v1783
    %v1960 = vunpack.c.l.b16 %v1784
    %v1961 = vunpack.c.l.b16 %v1785
    %v1962 = vunpack.c.h.b16 %v1782
    %v1963 = vunpack.c.h.b16 %v1783
    %v1964 = vunpack.c.h.b16 %v1784
    %v1965 = vunpack.c.h.b16 %v1785
    %v1966 = vunpack.c.l.b16 %v1786
    %v1967 = vunpack.c.l.b16 %v1787
    %v1968 = vunpack.c.l.b16 %v1788
    %v1969 = vunpack.c.l.b16 %v1789
    %v1970 = vunpack.c.h.b16 %v1786
    %v1971 = vunpack.c.h.b16 %v1787
    %v1972 = vunpack.c.h.b16 %v1788
    %v1973 = vunpack.c.h.b16 %v1789
    %v1974 = vunpack.c.l.b16 %v1790
    %v1975 = vunpack.c.l.b16 %v1791
    %v1976 = vunpack.c.l.b16 %v1792
    %v1977 = vunpack.c.l.b16 %v1793
    %v1978 = vunpack.c.h.b16 %v1790
    %v1979 = vunpack.c.h.b16 %v1791
    %v1980 = vunpack.c.h.b16 %v1792
    %v1981 = vunpack.c.h.b16 %v1793
    %v1982 = vunpack.c.l.b16 %v1794
    %v1983 = vunpack.c.l.b16 %v1795
    %v1984 = vunpack.c.l.b16 %v1796
    %v1985 = vunpack.c.l.b16 %v1797
    %v1986 = vunpack.c.h.b16 %v1794
    %v1987 = vunpack.c.h.b16 %v1795
    %v1988 = vunpack.c.h.b16 %v1796
    %v1989 = vunpack.c.h.b16 %v1797
    %v1990 = vpack.c.b16 %v1863, %v1862
    %v1991 = vpack.c.b16 %v1865, %v1864
    %v1992 = vpack.c.b16 %v1867, %v1866
    %v1993 = vpack.c.b16 %v1869, %v1868
    %v1994 = vpack.c.b16 %v1871, %v1870
    %v1995 = vpack.c.b16 %v1873, %v1872
    %v1996 = vpack.c.b16 %v1875, %v1874
    %v1997 = vpack.c.b16 %v1877, %v1876
    %v1998 = vpack.c.b16 %v1879, %v1878
    %v1999 = vpack.c.b16 %v1881, %v1880
    %v2000 = vpack.c.b16 %v1883, %v1882
    %v2001 = vpack.c.b16 %v1885, %v1884
    %v2002 = vpack.c.b16 %v1887, %v1886
    %v2003 = vpack.c.b16 %v1889, %v1888
    %v2004 = vpack.c.b16 %v1891, %v1890
    %v2005 = vpack.c.b16 %v1893, %v1892
    %v2006 = vpack.c.b16 %v1895, %v1894
    %v2007 = vpack.c.b16 %v1897, %v1896
    %v2008 = vpack.c.b16 %v1899, %v1898
    %v2009 = vpack.c.b16 %v1901, %v1900
    %v2010 = vpack.c.b16 %v1903, %v1902
    %v2011 = vpack.c.b16 %v1905, %v1904
    %v2012 = vpack.c.b16 %v1907, %v1906
    %v2013 = vpack.c.b16 %v1909, %v1908
    %v2014 = vpack.c.b16 %v1911, %v1910
    %v2015 = vpack.c.b16 %v1913, %v1912
    %v2016 = vpack.c.b16 %v1915, %v1914
    %v2017 = vpack.c.b16 %v1917, %v1916
    %v2018 = vpack.c.b16 %v1919, %v1918
    %v2019 = vpack.c.b16 %v1921, %v1920
    %v2020 = vpack.c.b16 %v1923, %v1922
    %v2021 = vpack.c.b16 %v1925, %v1924
    %v2022 = vpack.c.b16 %v1927, %v1926
    %v2023 = vpack.c.b16 %v1929, %v1928
    %v2024 = vpack.c.b16 %v1931, %v1930
    %v2025 = vpack.c.b16 %v1933, %v1932
    %v2026 = vpack.c.b16 %v1935, %v1934
    %v2027 = vpack.c.b16 %v1937, %v1936
    %v2028 = vpack.c.b16 %v1939, %v1938
    %v2029 = vpack.c.b16 %v1941, %v1940
    %v2030 = vpack.c.b16 %v1943, %v1942
    %v2031 = vpack.c.b16 %v1945, %v1944
    %v2032 = vpack.c.b16 %v1947, %v1946
    %v2033 = vpack.c.b16 %v1949, %v1948
    %v2034 = vpack.c.b16 %v1951, %v1950
    %v2035 = vpack.c.b16 %v1953, %v1952
    %v2036 = vpack.c.b16 %v1955, %v1954
    %v2037 = vpack.c.b16 %v1957, %v1956
    %v2038 = vpack.c.b16 %v1959, %v1958
    %v2039 = vpack.c.b16 %v1961, %v1960
    %v2040 = vpack.c.b16 %v1963, %v1962
    %v2041 = vpack.c.b16 %v1965, %v1964
    %v2042 = vpack.c.b16 %v1967, %v1966
    %v2043 = vpack.c.b16 %v1969, %v1968
    %v2044 = vpack.c.b16 %v1971, %v1970
    %v2045 = vpack.c.b16 %v1973, %v1972
    %v2046 = vpack.c.b16 %v1975, %v1974
    %v2047 = vpack.c.b16 %v1977, %v1976
    %v2048 = vpack.c.b16 %v1979, %v1978
    %v2049 = vpack.c.b16 %v1981, %v1980
    %v2050 = vpack.c.b16 %v1983, %v1982
    %v2051 = vpack.c.b16 %v1985, %v1984
    %v2052 = vpack.c.b16 %v1987, %v1986
    %v2053 = vpack.c.b16 %v1989, %v1988
    %2118 = vst [vmem:[#allocation7] sm:$0xff] %v1990
    %2119 = vst [vmem:[#allocation7 + $0x8] sm:$0xff] %v1991
    %2120 = vst [vmem:[#allocation7 + $0x10] sm:$0xff] %v1992
    %2121 = vst [vmem:[#allocation7 + $0x18] sm:$0xff] %v1993
    %2122 = vst [vmem:[#allocation7 + $0x20] sm:$0xff] %v1994
    %2123 = vst [vmem:[#allocation7 + $0x28] sm:$0xff] %v1995
    %2124 = vst [vmem:[#allocation7 + $0x30] sm:$0xff] %v1996
    %2125 = vst [vmem:[#allocation7 + $0x38] sm:$0xff] %v1997
    %2126 = vst [vmem:[#allocation7 + $0x40] sm:$0xff] %v1998
    %2127 = vst [vmem:[#allocation7 + $0x48] sm:$0xff] %v1999
    %2128 = vst [vmem:[#allocation7 + $0x50] sm:$0xff] %v2000
    %2129 = vst [vmem:[#allocation7 + $0x58] sm:$0xff] %v2001
    %2130 = vst [vmem:[#allocation7 + $0x60] sm:$0xff] %v2002
    %2131 = vst [vmem:[#allocation7 + $0x68] sm:$0xff] %v2003
    %2132 = vst [vmem:[#allocation7 + $0x70] sm:$0xff] %v2004
    %2133 = vst [vmem:[#allocation7 + $0x78] sm:$0xff] %v2005
    %2134 = vst [vmem:[#allocation7 + $0x80] sm:$0xff] %v2006
    %2135 = vst [vmem:[#allocation7 + $0x88] sm:$0xff] %v2007
    %2136 = vst [vmem:[#allocation7 + $0x90] sm:$0xff] %v2008
    %2137 = vst [vmem:[#allocation7 + $0x98] sm:$0xff] %v2009
    %2138 = vst [vmem:[#allocation7 + $0xa0] sm:$0xff] %v2010
    %2139 = vst [vmem:[#allocation7 + $0xa8] sm:$0xff] %v2011
    %2140 = vst [vmem:[#allocation7 + $0xb0] sm:$0xff] %v2012
    %2141 = vst [vmem:[#allocation7 + $0xb8] sm:$0xff] %v2013
    %2142 = vst [vmem:[#allocation7 + $0xc0] sm:$0xff] %v2014
    %2143 = vst [vmem:[#allocation7 + $0xc8] sm:$0xff] %v2015
    %2144 = vst [vmem:[#allocation7 + $0xd0] sm:$0xff] %v2016
    %2145 = vst [vmem:[#allocation7 + $0xd8] sm:$0xff] %v2017
    %2146 = vst [vmem:[#allocation7 + $0xe0] sm:$0xff] %v2018
    %2147 = vst [vmem:[#allocation7 + $0xe8] sm:$0xff] %v2019
    %2148 = vst [vmem:[#allocation7 + $0xf0] sm:$0xff] %v2020
    %2149 = vst [vmem:[#allocation7 + $0xf8] sm:$0xff] %v2021
    %2150 = vst [vmem:[#allocation7 + $0x100] sm:$0xff] %v2022
    %2151 = vst [vmem:[#allocation7 + $0x108] sm:$0xff] %v2023
    %2152 = vst [vmem:[#allocation7 + $0x110] sm:$0xff] %v2024
    %2153 = vst [vmem:[#allocation7 + $0x118] sm:$0xff] %v2025
    %2154 = vst [vmem:[#allocation7 + $0x120] sm:$0xff] %v2026
    %2155 = vst [vmem:[#allocation7 + $0x128] sm:$0xff] %v2027
    %2156 = vst [vmem:[#allocation7 + $0x130] sm:$0xff] %v2028
    %2157 = vst [vmem:[#allocation7 + $0x138] sm:$0xff] %v2029
    %2158 = vst [vmem:[#allocation7 + $0x140] sm:$0xff] %v2030
    %2159 = vst [vmem:[#allocation7 + $0x148] sm:$0xff] %v2031
    %2160 = vst [vmem:[#allocation7 + $0x150] sm:$0xff] %v2032
    %2161 = vst [vmem:[#allocation7 + $0x158] sm:$0xff] %v2033
    %2162 = vst [vmem:[#allocation7 + $0x160] sm:$0xff] %v2034
    %2163 = vst [vmem:[#allocation7 + $0x168] sm:$0xff] %v2035
    %2164 = vst [vmem:[#allocation7 + $0x170] sm:$0xff] %v2036
    %2165 = vst [vmem:[#allocation7 + $0x178] sm:$0xff] %v2037
    %2166 = vst [vmem:[#allocation7 + $0x180] sm:$0xff] %v2038
    %2167 = vst [vmem:[#allocation7 + $0x188] sm:$0xff] %v2039
    %2168 = vst [vmem:[#allocation7 + $0x190] sm:$0xff] %v2040
    %2169 = vst [vmem:[#allocation7 + $0x198] sm:$0xff] %v2041
    %2170 = vst [vmem:[#allocation7 + $0x1a0] sm:$0xff] %v2042
    %2171 = vst [vmem:[#allocation7 + $0x1a8] sm:$0xff] %v2043
    %2172 = vst [vmem:[#allocation7 + $0x1b0] sm:$0xff] %v2044
    %2173 = vst [vmem:[#allocation7 + $0x1b8] sm:$0xff] %v2045
    %2174 = vst [vmem:[#allocation7 + $0x1c0] sm:$0xff] %v2046
    %2175 = vst [vmem:[#allocation7 + $0x1c8] sm:$0xff] %v2047
    %2176 = vst [vmem:[#allocation7 + $0x1d0] sm:$0xff] %v2048
    %2177 = vst [vmem:[#allocation7 + $0x1d8] sm:$0xff] %v2049
    %2178 = vst [vmem:[#allocation7 + $0x1e0] sm:$0xff] %v2050
    %2179 = vst [vmem:[#allocation7 + $0x1e8] sm:$0xff] %v2051
    %2180 = vst [vmem:[#allocation7 + $0x1f0] sm:$0xff] %v2052
    %2181 = vst [vmem:[#allocation7 + $0x1f8] sm:$0xff] %v2053
    // Predicated region
    $region22: #{tpu_custom_call.1} parent=1 // pred_check
      _
    $region23: #{tpu_custom_call.1} parent=1 // pred_check_branch
      %2183 = sbr.rel (0) target = $region25
    $region24: #{tpu_custom_call.1} parent=1 // pred_region
      %s2185 = ssub.s32 8192, 8192
      %2186 = vsyncadd [#allocation4], %s2185
      %s2187 = sshll.u32 [#allocation7], 4
      %s2188 = int_to_ptr.vmem [resolvable:$true] %s2187
      %2193 = dma.vmem_to_hbm [thread:$0]  %s2188, 8192, %s3, [#allocation4], 256, 256, 16
    $region25: #{tpu_custom_call.1} parent=1 // pred_fallthru
      _
    // Predicated region
    $region26: #{tpu_custom_call.1} parent=1 // pred_check
      _
    $region27: #{tpu_custom_call.1} parent=1 // pred_check_branch
      %2195 = sbr.rel (0) target = $region29
    $region28: #{tpu_custom_call.1} parent=1 // pred_region
      %2196 = dma.done [#allocation4], 8192
    $region29: #{tpu_custom_call.1} parent=1 // pred_fallthru
      _
    %2197 = vsyncpa [#allocation3], 1
    %2198 = vsyncpa [#allocation6], 1
    %2199 = vsyncpa [#allocation4], 1

</llo_original>
